<compile_context>
chip_gen: v6e
topology: v6e:2x2x1
jax: 0.10.0
libtpu: 0.0.40
codegen_flags: <defaults>
</compile_context>

<pallas_src>
import functools

import jax
import jax.numpy as jnp
from jax.experimental import pallas as pl
from jax.experimental.pallas import tpu as pltpu


def _round_up(x, m):
    return (x + m - 1) // m * m


_VMEM_SPEC = pl.BlockSpec(memory_space=pltpu.MemorySpace.VMEM)


# -----------------------------------------------------------------------------
# Attention kernel
#   attn_score  = (hidden @ W) @ node_embed.T   (node_embed.T passed pre-made)
#   attn_weight = softmax(attn_score)           (lane-dense: Np padded to 128)
#   attn_node   = attn_weight @ node_embed
#   out         = hidden @ Wlin_h + attn_node @ Wlin_a + blin
# -----------------------------------------------------------------------------
def _attention_kernel(hidden_ref, node_ref, node_t_ref, mask_ref, w_ref,
                      wlin_h_ref, wlin_a_ref, blin_ref, out_ref):
    h = hidden_ref[...]                          # (Bp, Hp) f32
    h_bf = h.astype(jnp.bfloat16)

    hw = jnp.dot(h_bf, w_ref[...], preferred_element_type=jnp.float32)      # (Bp, Hp)
    # Plain matmul against the pre-transposed node embeddings (no in-kernel
    # transpose / dot_general on a transposed RHS).
    score = jnp.dot(hw.astype(jnp.bfloat16), node_t_ref[...],
                    preferred_element_type=jnp.float32)                     # (Bp, Np)
    score = score + mask_ref[...]                # -inf on padded node columns

    m = jnp.max(score, axis=-1, keepdims=True)
    p = jnp.exp(score - m)                                                  # unnormalized
    denom = jnp.sum(p, axis=-1, keepdims=True)                              # (Bp, 1)
    attn_node = jnp.dot(p.astype(jnp.bfloat16), node_ref[...],
                        preferred_element_type=jnp.float32)                 # (Bp, Hp)
    # Exact normalization (attention runs once per forward; cost is negligible).
    attn_node = attn_node * pl.reciprocal(denom, approx=False)

    out = (jnp.dot(h_bf, wlin_h_ref[...], preferred_element_type=jnp.float32)
           + jnp.dot(attn_node.astype(jnp.bfloat16), wlin_a_ref[...],
                     preferred_element_type=jnp.float32)
           + blin_ref[...])
    out_ref[...] = out.astype(out_ref.dtype)


def attention_forward(hidden, node_embed_bf16, node_embed_t_bf16, node_mask, prep):
    """hidden (Bp,Hp) f32, node_embed (Np,Hp)/(Hp,Np) bf16, node_mask (1,Np) f32."""
    Bp, Hp = hidden.shape
    return pl.pallas_call(
        _attention_kernel,
        out_shape=jax.ShapeDtypeStruct((Bp, Hp), jnp.float32),
        in_specs=[_VMEM_SPEC] * 8,
        out_specs=_VMEM_SPEC,
    )(hidden, node_embed_bf16, node_embed_t_bf16, node_mask,
      prep["attn_w"], prep["attn_lin_h"], prep["attn_lin_a"], prep["attn_lin_b"])


# -----------------------------------------------------------------------------
# Fused GRU decoder (torch GRUCell semantics) + output Linear(H -> V)
# Single ungridded pallas_call:
#   prologue : gi_all = y_all @ [Wir|Wiz|Win] + [bir|biz|bin]   (one big matmul)
#   per step : gh = h @ [Whr|Whz|Whn] + b_h
#              r  = sigmoid(gi_r + gh_r);  z = sigmoid(gi_z + gh_z)
#              n  = tanh(gi_n + r * gh_n); h' = (1-z)*n + z*h   -> h_all scratch
#   epilogue : logits = H_all @ Wout + bout                     (one big matmul)
# -----------------------------------------------------------------------------
def _decoder_kernel(y_ref, h0_ref, wi_ref, wh_ref, bi_ref, bh_ref,
                    wout_ref, bout_ref, logits_ref, h_all_scratch,
                    *, seq_len, bp, hp):
    # Hoisted input-gate projection for ALL timesteps (M = seq_len*Bp).
    gi_all = (jnp.dot(y_ref[...], wi_ref[...],
                      preferred_element_type=jnp.float32)
              + bi_ref[...])                               # (seq_len*Bp, 3Hp) f32

    h = h0_ref[...]                                        # (Bp, Hp) f32
    wh = wh_ref[...]                                       # (Hp, 3Hp) bf16, resident
    bh = bh_ref[...]                                       # (1, 3Hp) f32

    # Fully unrolled recurrence: only the (Bp,Hp)x(Hp,3Hp) gh matmul and the f32
    # gate math remain on the serial critical path.
    for t in range(seq_len):
        gi = gi_all[t * bp:(t + 1) * bp, :]
        gh = (jnp.dot(h.astype(jnp.bfloat16), wh,
                      preferred_element_type=jnp.float32) + bh)
        r = jax.nn.sigmoid(gi[:, 0:hp] + gh[:, 0:hp])
        z = jax.nn.sigmoid(gi[:, hp:2 * hp] + gh[:, hp:2 * hp])
        n = jnp.tanh(gi[:, 2 * hp:3 * hp] + r * gh[:, 2 * hp:3 * hp])
        h = (1.0 - z) * n + z * h
        h_all_scratch[t * bp:(t + 1) * bp, :] = h

    # Hoisted output projection for ALL timesteps (M = seq_len*Bp).
    logits = (jnp.dot(h_all_scratch[...].astype(jnp.bfloat16), wout_ref[...],
                      preferred_element_type=jnp.float32)
              + bout_ref[...])
    logits_ref[...] = logits.astype(logits_ref.dtype)


def decoder_forward(y_bf16, h0, prep, *, seq_len):
    """y_bf16 (seq_len*Bp, Vp) bf16, h0 (Bp, Hp) f32 -> (seq_len*Bp, Vp) f32."""
    Bp, Hp = h0.shape
    Vp = prep["wout"].shape[1]
    kernel = functools.partial(_decoder_kernel, seq_len=seq_len, bp=Bp, hp=Hp)
    return pl.pallas_call(
        kernel,
        out_shape=jax.ShapeDtypeStruct((seq_len * Bp, Vp), jnp.float32),
        in_specs=[_VMEM_SPEC] * 8,
        out_specs=_VMEM_SPEC,
        scratch_shapes=[pltpu.VMEM((seq_len * Bp, Hp), jnp.float32)],  # H_all
    )(y_bf16, h0,
      prep["gru_wi"], prep["gru_wh"], prep["gru_bi"], prep["gru_bh"],
      prep["wout"], prep["bout"])


# -----------------------------------------------------------------------------
# Graph2Seq forward (mode='train', conf.rnn_type='gru',
#                    conf.teacher_forcing_ratio=1.0 so the loop is deterministic)
# -----------------------------------------------------------------------------
def graph2seq_forward(data_x, batch_assign, y_input, prep, *, batch_size, seq_len):
    B = batch_size
    V = y_input.shape[1]
    Vp = prep["wout"].shape[1]
    Np = prep["node_mask"].shape[1]
    Bp = _round_up(B, 8)

    # --- encoder stand-in (glue; the real GNN encoder is not defined) ----------
    # TODO(synk): replace with the real graph encoder once its definition exists.
    node_embed = jnp.tanh(data_x @ prep["w_enc"])                   # (N, Hp); padded cols stay 0
    one_hot = jax.nn.one_hot(batch_assign, B, dtype=jnp.float32)    # (N, B)
    counts = jnp.maximum(one_hot.sum(axis=0, keepdims=True), 1.0)   # (1, B)
    hidden = (one_hot.T @ node_embed) / counts.T                    # (B, Hp)
    hidden = jnp.pad(hidden, ((0, Bp - B), (0, 0)))                 # (Bp, Hp)

    N = node_embed.shape[0]
    node_embed_p = jnp.pad(node_embed, ((0, Np - N), (0, 0))).astype(jnp.bfloat16)
    node_embed_t = node_embed_p.T                                   # (Hp, Np), XLA-side transpose

    # --- attention (Pallas kernel) ---------------------------------------------
    hidden = attention_forward(hidden, node_embed_p, node_embed_t,
                               prep["node_mask"], prep)             # (Bp, Hp)

    # --- decoder (single fused Pallas kernel) -----------------------------------
    # TODO(synk): the stochastic teacher-forcing branch and the LSTM path of the
    # reference are unmodeled (teacher_forcing_ratio fixed to 1.0, rnn_type='gru').
    y3 = y_input.reshape(seq_len, B, V)
    y_p = jnp.pad(y3, ((0, 0), (0, Bp - B), (0, Vp - V)))
    y_p = y_p.reshape(seq_len * Bp, Vp).astype(jnp.bfloat16)        # host-side bf16 cast
    logits_p = decoder_forward(y_p, hidden, prep, seq_len=seq_len)  # (seq_len*Bp, Vp)
    out = logits_p.reshape(seq_len, Bp, Vp)[:, :B, :V].reshape(seq_len * B, V)
    return out                                                      # same shape as y_input


# -----------------------------------------------------------------------------
# Deterministic raw parameter init (torch-equivalent layouts)
# -----------------------------------------------------------------------------
def init_params(key, feat_dim, hidden_dim, vocab_dim):
    keys = jax.random.split(key, 18)
    u = lambda k, shape, scale: jax.random.uniform(k, shape, jnp.float32, -scale, scale)
    H, V, F = hidden_dim, vocab_dim, feat_dim
    s_h = (1.0 / H) ** 0.5
    s_v = (1.0 / V) ** 0.5
    s_f = (1.0 / F) ** 0.5
    return {
        # encoder stand-in
        "w_enc": u(keys[0], (F, H), s_f),
        # Attention: weight (H,H) kaiming-uniform-ish; Linear(2H -> H) torch layout
        "attn_w": u(keys[1], (H, H), (6.0 / H) ** 0.5),
        "attn_lin_w": u(keys[2], (H, 2 * H), (1.0 / (2 * H)) ** 0.5),
        "attn_lin_b": u(keys[3], (H,), (1.0 / (2 * H)) ** 0.5),
        # GRU cell weights in x @ W layout (in, out), torch GRUCell semantics
        "wir": u(keys[4], (V, H), s_v), "wiz": u(keys[5], (V, H), s_v),
        "win": u(keys[6], (V, H), s_v),
        "whr": u(keys[7], (H, H), s_h), "whz": u(keys[8], (H, H), s_h),
        "whn": u(keys[9], (H, H), s_h),
        "bir": u(keys[10], (H,), s_h), "biz": u(keys[11], (H,), s_h),
        "bin": u(keys[12], (H,), s_h),
        "bhr": u(keys[13], (H,), s_h), "bhz": u(keys[14], (H,), s_h),
        "bhn": u(keys[15], (H,), s_h),
        # output projection H -> V
        "wout": u(keys[16], (H, V), s_h),
        "bout": u(keys[17], (V,), s_h),
    }


# -----------------------------------------------------------------------------
# One-time parameter preprocessing: pad lane dims to 128 (incl. Np), fuse GRU
# gate weights, pre-transpose the attention Linear split, cast matmul weights to
# bf16.
# -----------------------------------------------------------------------------
def prepare_params(raw, *, hidden_dim, vocab_dim, num_nodes):
    H, V = hidden_dim, vocab_dim
    Hp = _round_up(H, 128)
    Vp = _round_up(V, 128)
    Np = _round_up(num_nodes, 128)   # lane-dense attention score / softmax

    def pad2(x, r, c):
        return jnp.pad(x, ((0, r - x.shape[0]), (0, c - x.shape[1])))

    def pad1(x, n):
        return jnp.pad(x, (0, n - x.shape[0]))

    # Encoder weight padded on output so node_embed is born lane-padded
    # (tanh(0) == 0 keeps the padding exactly zero).
    w_enc = pad2(raw["w_enc"], raw["w_enc"].shape[0], Hp)

    # Attention: split torch Linear(2H -> H) weight into [hidden | attn_node]
    # halves, pre-transposed to x @ W layout.
    attn_w = pad2(raw["attn_w"], Hp, Hp).astype(jnp.bfloat16)
    attn_lin_h = pad2(raw["attn_lin_w"][:, :H].T, Hp, Hp).astype(jnp.bfloat16)
    attn_lin_a = pad2(raw["attn_lin_w"][:, H:].T, Hp, Hp).astype(jnp.bfloat16)
    attn_lin_b = pad1(raw["attn_lin_b"], Hp).reshape(1, Hp)

    # GRU: fuse the three gate matmuls into one (in, 3*Hp) weight per input.
    def fuse_w(a, b, c, rp):
        return jnp.concatenate(
            [pad2(a, rp, Hp), pad2(b, rp, Hp), pad2(c, rp, Hp)], axis=1)

    def fuse_b(a, b, c):
        return jnp.concatenate([pad1(a, Hp), pad1(b, Hp), pad1(c, Hp)]).reshape(1, 3 * Hp)

    gru_wi = fuse_w(raw["wir"], raw["wiz"], raw["win"], Vp).astype(jnp.bfloat16)
    gru_wh = fuse_w(raw["whr"], raw["whz"], raw["whn"], Hp).astype(jnp.bfloat16)
    gru_bi = fuse_b(raw["bir"], raw["biz"], raw["bin"])
    gru_bh = fuse_b(raw["bhr"], raw["bhz"], raw["bhn"])

    wout = pad2(raw["wout"], Hp, Vp).astype(jnp.bfloat16)
    bout = pad1(raw["bout"], Vp).reshape(1, Vp)

    # Additive mask (-inf on padded node rows) so node-row padding cannot leak
    # into the attention softmax.
    node_mask = jnp.where(jnp.arange(Np) < num_nodes, 0.0, -1e30)
    node_mask = node_mask.reshape(1, Np).astype(jnp.float32)

    return {
        "w_enc": w_enc,
        "attn_w": attn_w, "attn_lin_h": attn_lin_h, "attn_lin_a": attn_lin_a,
        "attn_lin_b": attn_lin_b,
        "gru_wi": gru_wi, "gru_wh": gru_wh, "gru_bi": gru_bi, "gru_bh": gru_bh,
        "wout": wout, "bout": bout,
        "node_mask": node_mask,
    }


if __name__ == "__main__":
    # conf-equivalents (small shapes)
    batch_size = 2          # conf.train_batch_size
    max_seq_len = 3
    seq_len = max_seq_len + 1
    hidden_dim = 32         # conf.rnn_hidden
    feat_dim = 16           # node feature dim
    vocab_dim = 8           # decoder token / output dim
    num_nodes = 16          # total graph nodes across the batch

    key = jax.random.PRNGKey(0)
    k_x, k_y, k_p = jax.random.split(key, 3)

    data_x = jax.random.normal(k_x, (num_nodes, feat_dim), jnp.float32)
    batch_assign = jnp.repeat(jnp.arange(batch_size), num_nodes // batch_size)
    y_input = jax.random.normal(k_y, (seq_len * batch_size, vocab_dim), jnp.float32)

    raw_params = init_params(k_p, feat_dim, hidden_dim, vocab_dim)
    prep = prepare_params(raw_params, hidden_dim=hidden_dim, vocab_dim=vocab_dim,
                          num_nodes=num_nodes)

    fwd = jax.jit(functools.partial(graph2seq_forward, batch_size=batch_size,
                                    seq_len=seq_len))
    outputs = fwd(data_x, batch_assign, y_input, prep)
    outputs = jax.block_until_ready(outputs)

    assert outputs.shape == y_input.shape, (outputs.shape, y_input.shape)
    assert bool(jnp.all(jnp.isfinite(outputs)))
    print("KERNEL_OK")
</pallas_src>

<mosaic_0001>
module attributes {stable_mosaic.version = 11 : i64} {
  func.func @_attention_kernel(%arg0: memref<8x128xf32, #tpu.memory_space<vmem>>, %arg1: memref<128x128xbf16, #tpu.memory_space<vmem>>, %arg2: memref<128x128xbf16, #tpu.memory_space<vmem>>, %arg3: memref<1x128xf32, #tpu.memory_space<vmem>>, %arg4: memref<128x128xbf16, #tpu.memory_space<vmem>>, %arg5: memref<128x128xbf16, #tpu.memory_space<vmem>>, %arg6: memref<128x128xbf16, #tpu.memory_space<vmem>>, %arg7: memref<1x128xf32, #tpu.memory_space<vmem>>, %arg8: memref<8x128xf32, #tpu.memory_space<vmem>>) attributes {dimension_semantics = [], scalar_prefetch = 0 : i64, scratch_operands = 0 : i64, tpu.core_type = #tpu.core_type<tc>} {
    %c0 = arith.constant 0 : index
    %c0_0 = arith.constant 0 : index
    %0 = vector.load %arg0[%c0, %c0_0] : memref<8x128xf32, #tpu.memory_space<vmem>>, vector<8x128xf32>
    %1 = arith.truncf %0 : vector<8x128xf32> to vector<8x128xbf16>
    %c0_1 = arith.constant 0 : index
    %c0_2 = arith.constant 0 : index
    %2 = vector.load %arg4[%c0_1, %c0_2] : memref<128x128xbf16, #tpu.memory_space<vmem>>, vector<128x128xbf16>
    %cst = arith.constant dense<0.000000e+00> : vector<8x128xf32>
    %3 = tpu.matmul %1, %2, %cst {dimension_numbers = #tpu.dot_dimension_numbers<[1], [0], [0], [1], [0, 0, 1, 1], [], []>} : vector<8x128xbf16>, vector<128x128xbf16>, vector<8x128xf32> -> vector<8x128xf32>
    %4 = arith.truncf %3 : vector<8x128xf32> to vector<8x128xbf16>
    %c0_3 = arith.constant 0 : index
    %c0_4 = arith.constant 0 : index
    %5 = vector.load %arg2[%c0_3, %c0_4] : memref<128x128xbf16, #tpu.memory_space<vmem>>, vector<128x128xbf16>
    %cst_5 = arith.constant dense<0.000000e+00> : vector<8x128xf32>
    %6 = tpu.matmul %4, %5, %cst_5 {dimension_numbers = #tpu.dot_dimension_numbers<[1], [0], [0], [1], [0, 0, 1, 1], [], []>} : vector<8x128xbf16>, vector<128x128xbf16>, vector<8x128xf32> -> vector<8x128xf32>
    %c0_6 = arith.constant 0 : index
    %c0_7 = arith.constant 0 : index
    %7 = vector.load %arg3[%c0_6, %c0_7] : memref<1x128xf32, #tpu.memory_space<vmem>>, vector<1x128xf32>
    %8 = vector.broadcast %7 : vector<1x128xf32> to vector<8x128xf32>
    %9 = arith.addf %6, %8 : vector<8x128xf32>
    %cst_8 = arith.constant dense<0xFF800000> : vector<8xf32>
    %10 = vector.multi_reduction <maximumf>, %9, %cst_8 [1] : vector<8x128xf32> to vector<8xf32>
    %11 = vector.shape_cast %10 : vector<8xf32> to vector<8x1xf32>
    %12 = vector.broadcast %11 : vector<8x1xf32> to vector<8x128xf32>
    %13 = arith.subf %9, %12 : vector<8x128xf32>
    %14 = math.exp %13 : vector<8x128xf32>
    %cst_9 = arith.constant dense<0.000000e+00> : vector<8xf32>
    %15 = vector.multi_reduction <add>, %14, %cst_9 [1] : vector<8x128xf32> to vector<8xf32>
    %16 = vector.shape_cast %15 : vector<8xf32> to vector<8x1xf32>
    %17 = arith.truncf %14 : vector<8x128xf32> to vector<8x128xbf16>
    %c0_10 = arith.constant 0 : index
    %c0_11 = arith.constant 0 : index
    %18 = vector.load %arg1[%c0_10, %c0_11] : memref<128x128xbf16, #tpu.memory_space<vmem>>, vector<128x128xbf16>
    %cst_12 = arith.constant dense<0.000000e+00> : vector<8x128xf32>
    %19 = tpu.matmul %17, %18, %cst_12 {dimension_numbers = #tpu.dot_dimension_numbers<[1], [0], [0], [1], [0, 0, 1, 1], [], []>} : vector<8x128xbf16>, vector<128x128xbf16>, vector<8x128xf32> -> vector<8x128xf32>
    %20 = tpu.reciprocal %16 : vector<8x1xf32> -> vector<8x1xf32>
    %21 = vector.broadcast %20 : vector<8x1xf32> to vector<8x128xf32>
    %22 = arith.mulf %19, %21 : vector<8x128xf32>
    %c0_13 = arith.constant 0 : index
    %c0_14 = arith.constant 0 : index
    %23 = vector.load %arg5[%c0_13, %c0_14] : memref<128x128xbf16, #tpu.memory_space<vmem>>, vector<128x128xbf16>
    %cst_15 = arith.constant dense<0.000000e+00> : vector<8x128xf32>
    %24 = tpu.matmul %1, %23, %cst_15 {dimension_numbers = #tpu.dot_dimension_numbers<[1], [0], [0], [1], [0, 0, 1, 1], [], []>} : vector<8x128xbf16>, vector<128x128xbf16>, vector<8x128xf32> -> vector<8x128xf32>
    %25 = arith.truncf %22 : vector<8x128xf32> to vector<8x128xbf16>
    %c0_16 = arith.constant 0 : index
    %c0_17 = arith.constant 0 : index
    %26 = vector.load %arg6[%c0_16, %c0_17] : memref<128x128xbf16, #tpu.memory_space<vmem>>, vector<128x128xbf16>
    %cst_18 = arith.constant dense<0.000000e+00> : vector<8x128xf32>
    %27 = tpu.matmul %25, %26, %cst_18 {dimension_numbers = #tpu.dot_dimension_numbers<[1], [0], [0], [1], [0, 0, 1, 1], [], []>} : vector<8x128xbf16>, vector<128x128xbf16>, vector<8x128xf32> -> vector<8x128xf32>
    %28 = arith.addf %24, %27 : vector<8x128xf32>
    %c0_19 = arith.constant 0 : index
    %c0_20 = arith.constant 0 : index
    %29 = vector.load %arg7[%c0_19, %c0_20] : memref<1x128xf32, #tpu.memory_space<vmem>>, vector<1x128xf32>
    %30 = vector.broadcast %29 : vector<1x128xf32> to vector<8x128xf32>
    %31 = arith.addf %28, %30 : vector<8x128xf32>
    %c0_21 = arith.constant 0 : index
    %c0_22 = arith.constant 0 : index
    %32 = vector.load %arg8[%c0_21, %c0_22] : memref<8x128xf32, #tpu.memory_space<vmem>>, vector<8x128xf32>
    tpu.vector_store %arg8[%c0_21, %c0_22], %31 {strides = array<i32>} : memref<8x128xf32, #tpu.memory_space<vmem>>, vector<8x128xf32>,
    return
  }
}

module attributes {stable_mosaic.version = 11 : i64} {
  func.func @_decoder_kernel(%arg0: memref<32x128xbf16, #tpu.memory_space<vmem>>, %arg1: memref<8x128xf32, #tpu.memory_space<vmem>>, %arg2: memref<128x384xbf16, #tpu.memory_space<vmem>>, %arg3: memref<128x384xbf16, #tpu.memory_space<vmem>>, %arg4: memref<1x384xf32, #tpu.memory_space<vmem>>, %arg5: memref<1x384xf32, #tpu.memory_space<vmem>>, %arg6: memref<128x128xbf16, #tpu.memory_space<vmem>>, %arg7: memref<1x128xf32, #tpu.memory_space<vmem>>, %arg8: memref<32x128xf32, #tpu.memory_space<vmem>>, %arg9: memref<32x128xf32, #tpu.memory_space<vmem>>) attributes {dimension_semantics = [], scalar_prefetch = 0 : i64, scratch_operands = 1 : i64, tpu.core_type = #tpu.core_type<tc>} {
    %c0 = arith.constant 0 : index
    %c0_0 = arith.constant 0 : index
    %0 = vector.load %arg0[%c0, %c0_0] : memref<32x128xbf16, #tpu.memory_space<vmem>>, vector<32x128xbf16>
    %c0_1 = arith.constant 0 : index
    %c0_2 = arith.constant 0 : index
    %1 = vector.load %arg2[%c0_1, %c0_2] : memref<128x384xbf16, #tpu.memory_space<vmem>>, vector<128x384xbf16>
    %cst = arith.constant dense<0.000000e+00> : vector<32x384xf32>
    %2 = tpu.matmul %0, %1, %cst {dimension_numbers = #tpu.dot_dimension_numbers<[1], [0], [0], [1], [0, 0, 1, 1], [], []>} : vector<32x128xbf16>, vector<128x384xbf16>, vector<32x384xf32> -> vector<32x384xf32>
    %c0_3 = arith.constant 0 : index
    %c0_4 = arith.constant 0 : index
    %3 = vector.load %arg4[%c0_3, %c0_4] : memref<1x384xf32, #tpu.memory_space<vmem>>, vector<1x384xf32>
    %4 = vector.broadcast %3 : vector<1x384xf32> to vector<32x384xf32>
    %5 = arith.addf %2, %4 : vector<32x384xf32>
    %c0_5 = arith.constant 0 : index
    %c0_6 = arith.constant 0 : index
    %6 = vector.load %arg1[%c0_5, %c0_6] : memref<8x128xf32, #tpu.memory_space<vmem>>, vector<8x128xf32>
    %c0_7 = arith.constant 0 : index
    %c0_8 = arith.constant 0 : index
    %7 = vector.load %arg3[%c0_7, %c0_8] : memref<128x384xbf16, #tpu.memory_space<vmem>>, vector<128x384xbf16>
    %c0_9 = arith.constant 0 : index
    %c0_10 = arith.constant 0 : index
    %8 = vector.load %arg5[%c0_9, %c0_10] : memref<1x384xf32, #tpu.memory_space<vmem>>, vector<1x384xf32>
    %9 = vector.extract_strided_slice %5 {offsets = [0, 0], sizes = [8, 384], strides = [1, 1]} : vector<32x384xf32> to vector<8x384xf32>
    %10 = arith.truncf %6 : vector<8x128xf32> to vector<8x128xbf16>
    %cst_11 = arith.constant dense<0.000000e+00> : vector<8x384xf32>
    %11 = tpu.matmul %10, %7, %cst_11 {dimension_numbers = #tpu.dot_dimension_numbers<[1], [0], [0], [1], [0, 0, 1, 1], [], []>} : vector<8x128xbf16>, vector<128x384xbf16>, vector<8x384xf32> -> vector<8x384xf32>
    %12 = vector.broadcast %8 : vector<1x384xf32> to vector<8x384xf32>
    %13 = arith.addf %11, %12 : vector<8x384xf32>
    %14 = vector.extract_strided_slice %9 {offsets = [0, 0], sizes = [8, 128], strides = [1, 1]} : vector<8x384xf32> to vector<8x128xf32>
    %15 = vector.extract_strided_slice %13 {offsets = [0, 0], sizes = [8, 128], strides = [1, 1]} : vector<8x384xf32> to vector<8x128xf32>
    %16 = arith.addf %14, %15 : vector<8x128xf32>
    %17 = arith.negf %16 : vector<8x128xf32>
    %18 = math.exp %17 : vector<8x128xf32>
    %cst_12 = arith.constant 1.000000e+00 : f32
    %19 = vector.broadcast %cst_12 : f32 to vector<8x128xf32>
    %20 = arith.addf %19, %18 : vector<8x128xf32>
    %21 = arith.divf %19, %20 : vector<8x128xf32>
    %22 = vector.extract_strided_slice %9 {offsets = [0, 128], sizes = [8, 128], strides = [1, 1]} : vector<8x384xf32> to vector<8x128xf32>
    %23 = vector.extract_strided_slice %13 {offsets = [0, 128], sizes = [8, 128], strides = [1, 1]} : vector<8x384xf32> to vector<8x128xf32>
    %24 = arith.addf %22, %23 : vector<8x128xf32>
    %25 = arith.negf %24 : vector<8x128xf32>
    %26 = math.exp %25 : vector<8x128xf32>
    %cst_13 = arith.constant 1.000000e+00 : f32
    %27 = vector.broadcast %cst_13 : f32 to vector<8x128xf32>
    %28 = arith.addf %27, %26 : vector<8x128xf32>
    %29 = arith.divf %27, %28 : vector<8x128xf32>
    %30 = vector.extract_strided_slice %9 {offsets = [0, 256], sizes = [8, 128], strides = [1, 1]} : vector<8x384xf32> to vector<8x128xf32>
    %31 = vector.extract_strided_slice %13 {offsets = [0, 256], sizes = [8, 128], strides = [1, 1]} : vector<8x384xf32> to vector<8x128xf32>
    %32 = arith.mulf %21, %31 : vector<8x128xf32>
    %33 = arith.addf %30, %32 : vector<8x128xf32>
    %34 = math.tanh %33 : vector<8x128xf32>
    %cst_14 = arith.constant 1.000000e+00 : f32
    %35 = vector.broadcast %cst_14 : f32 to vector<8x128xf32>
    %36 = arith.subf %35, %29 : vector<8x128xf32>
    %37 = arith.mulf %36, %34 : vector<8x128xf32>
    %38 = arith.mulf %29, %6 : vector<8x128xf32>
    %39 = arith.addf %37, %38 : vector<8x128xf32>
    %c0_15 = arith.constant 0 : index
    %c0_16 = arith.constant 0 : index
    %40 = vector.load %arg9[%c0_15, %c0_16] : memref<32x128xf32, #tpu.memory_space<vmem>>, vector<8x128xf32>
    tpu.vector_store %arg9[%c0_15, %c0_16], %39 {strides = array<i32>} : memref<32x128xf32, #tpu.memory_space<vmem>>, vector<8x128xf32>,
    %41 = vector.extract_strided_slice %5 {offsets = [8, 0], sizes = [8, 384], strides = [1, 1]} : vector<32x384xf32> to vector<8x384xf32>
    %42 = arith.truncf %39 : vector<8x128xf32> to vector<8x128xbf16>
    %cst_17 = arith.constant dense<0.000000e+00> : vector<8x384xf32>
    %43 = tpu.matmul %42, %7, %cst_17 {dimension_numbers = #tpu.dot_dimension_numbers<[1], [0], [0], [1], [0, 0, 1, 1], [], []>} : vector<8x128xbf16>, vector<128x384xbf16>, vector<8x384xf32> -> vector<8x384xf32>
    %44 = vector.broadcast %8 : vector<1x384xf32> to vector<8x384xf32>
    %45 = arith.addf %43, %44 : vector<8x384xf32>
    %46 = vector.extract_strided_slice %41 {offsets = [0, 0], sizes = [8, 128], strides = [1, 1]} : vector<8x384xf32> to vector<8x128xf32>
    %47 = vector.extract_strided_slice %45 {offsets = [0, 0], sizes = [8, 128], strides = [1, 1]} : vector<8x384xf32> to vector<8x128xf32>
    %48 = arith.addf %46, %47 : vector<8x128xf32>
    %49 = arith.negf %48 : vector<8x128xf32>
    %50 = math.exp %49 : vector<8x128xf32>
    %cst_18 = arith.constant 1.000000e+00 : f32
    %51 = vector.broadcast %cst_18 : f32 to vector<8x128xf32>
    %52 = arith.addf %51, %50 : vector<8x128xf32>
    %53 = arith.divf %51, %52 : vector<8x128xf32>
    %54 = vector.extract_strided_slice %41 {offsets = [0, 128], sizes = [8, 128], strides = [1, 1]} : vector<8x384xf32> to vector<8x128xf32>
    %55 = vector.extract_strided_slice %45 {offsets = [0, 128], sizes = [8, 128], strides = [1, 1]} : vector<8x384xf32> to vector<8x128xf32>
    %56 = arith.addf %54, %55 : vector<8x128xf32>
    %57 = arith.negf %56 : vector<8x128xf32>
    %58 = math.exp %57 : vector<8x128xf32>
    %cst_19 = arith.constant 1.000000e+00 : f32
    %59 = vector.broadcast %cst_19 : f32 to vector<8x128xf32>
    %60 = arith.addf %59, %58 : vector<8x128xf32>
    %61 = arith.divf %59, %60 : vector<8x128xf32>
    %62 = vector.extract_strided_slice %41 {offsets = [0, 256], sizes = [8, 128], strides = [1, 1]} : vector<8x384xf32> to vector<8x128xf32>
    %63 = vector.extract_strided_slice %45 {offsets = [0, 256], sizes = [8, 128], strides = [1, 1]} : vector<8x384xf32> to vector<8x128xf32>
    %64 = arith.mulf %53, %63 : vector<8x128xf32>
    %65 = arith.addf %62, %64 : vector<8x128xf32>
    %66 = math.tanh %65 : vector<8x128xf32>
    %cst_20 = arith.constant 1.000000e+00 : f32
    %67 = vector.broadcast %cst_20 : f32 to vector<8x128xf32>
    %68 = arith.subf %67, %61 : vector<8x128xf32>
    %69 = arith.mulf %68, %66 : vector<8x128xf32>
    %70 = arith.mulf %61, %39 : vector<8x128xf32>
    %71 = arith.addf %69, %70 : vector<8x128xf32>
    %c8 = arith.constant 8 : index
    %c0_21 = arith.constant 0 : index
    %72 = vector.load %arg9[%c8, %c0_21] : memref<32x128xf32, #tpu.memory_space<vmem>>, vector<8x128xf32>
    tpu.vector_store %arg9[%c8, %c0_21], %71 {strides = array<i32>} : memref<32x128xf32, #tpu.memory_space<vmem>>, vector<8x128xf32>,
    %73 = vector.extract_strided_slice %5 {offsets = [16, 0], sizes = [8, 384], strides = [1, 1]} : vector<32x384xf32> to vector<8x384xf32>
    %74 = arith.truncf %71 : vector<8x128xf32> to vector<8x128xbf16>
    %cst_22 = arith.constant dense<0.000000e+00> : vector<8x384xf32>
    %75 = tpu.matmul %74, %7, %cst_22 {dimension_numbers = #tpu.dot_dimension_numbers<[1], [0], [0], [1], [0, 0, 1, 1], [], []>} : vector<8x128xbf16>, vector<128x384xbf16>, vector<8x384xf32> -> vector<8x384xf32>
    %76 = vector.broadcast %8 : vector<1x384xf32> to vector<8x384xf32>
    %77 = arith.addf %75, %76 : vector<8x384xf32>
    %78 = vector.extract_strided_slice %73 {offsets = [0, 0], sizes = [8, 128], strides = [1, 1]} : vector<8x384xf32> to vector<8x128xf32>
    %79 = vector.extract_strided_slice %77 {offsets = [0, 0], sizes = [8, 128], strides = [1, 1]} : vector<8x384xf32> to vector<8x128xf32>
    %80 = arith.addf %78, %79 : vector<8x128xf32>
    %81 = arith.negf %80 : vector<8x128xf32>
    %82 = math.exp %81 : vector<8x128xf32>
    %cst_23 = arith.constant 1.000000e+00 : f32
    %83 = vector.broadcast %cst_23 : f32 to vector<8x128xf32>
    %84 = arith.addf %83, %82 : vector<8x128xf32>
    %85 = arith.divf %83, %84 : vector<8x128xf32>
    %86 = vector.extract_strided_slice %73 {offsets = [0, 128], sizes = [8, 128], strides = [1, 1]} : vector<8x384xf32> to vector<8x128xf32>
    %87 = vector.extract_strided_slice %77 {offsets = [0, 128], sizes = [8, 128], strides = [1, 1]} : vector<8x384xf32> to vector<8x128xf32>
    %88 = arith.addf %86, %87 : vector<8x128xf32>
    %89 = arith.negf %88 : vector<8x128xf32>
    %90 = math.exp %89 : vector<8x128xf32>
    %cst_24 = arith.constant 1.000000e+00 : f32
    %91 = vector.broadcast %cst_24 : f32 to vector<8x128xf32>
    %92 = arith.addf %91, %90 : vector<8x128xf32>
    %93 = arith.divf %91, %92 : vector<8x128xf32>
    %94 = vector.extract_strided_slice %73 {offsets = [0, 256], sizes = [8, 128], strides = [1, 1]} : vector<8x384xf32> to vector<8x128xf32>
    %95 = vector.extract_strided_slice %77 {offsets = [0, 256], sizes = [8, 128], strides = [1, 1]} : vector<8x384xf32> to vector<8x128xf32>
    %96 = arith.mulf %85, %95 : vector<8x128xf32>
    %97 = arith.addf %94, %96 : vector<8x128xf32>
    %98 = math.tanh %97 : vector<8x128xf32>
    %cst_25 = arith.constant 1.000000e+00 : f32
    %99 = vector.broadcast %cst_25 : f32 to vector<8x128xf32>
    %100 = arith.subf %99, %93 : vector<8x128xf32>
    %101 = arith.mulf %100, %98 : vector<8x128xf32>
    %102 = arith.mulf %93, %71 : vector<8x128xf32>
    %103 = arith.addf %101, %102 : vector<8x128xf32>
    %c16 = arith.constant 16 : index
    %c0_26 = arith.constant 0 : index
    %104 = vector.load %arg9[%c16, %c0_26] : memref<32x128xf32, #tpu.memory_space<vmem>>, vector<8x128xf32>
    tpu.vector_store %arg9[%c16, %c0_26], %103 {strides = array<i32>} : memref<32x128xf32, #tpu.memory_space<vmem>>, vector<8x128xf32>,
    %105 = vector.extract_strided_slice %5 {offsets = [24, 0], sizes = [8, 384], strides = [1, 1]} : vector<32x384xf32> to vector<8x384xf32>
    %106 = arith.truncf %103 : vector<8x128xf32> to vector<8x128xbf16>
    %cst_27 = arith.constant dense<0.000000e+00> : vector<8x384xf32>
    %107 = tpu.matmul %106, %7, %cst_27 {dimension_numbers = #tpu.dot_dimension_numbers<[1], [0], [0], [1], [0, 0, 1, 1], [], []>} : vector<8x128xbf16>, vector<128x384xbf16>, vector<8x384xf32> -> vector<8x384xf32>
    %108 = vector.broadcast %8 : vector<1x384xf32> to vector<8x384xf32>
    %109 = arith.addf %107, %108 : vector<8x384xf32>
    %110 = vector.extract_strided_slice %105 {offsets = [0, 0], sizes = [8, 128], strides = [1, 1]} : vector<8x384xf32> to vector<8x128xf32>
    %111 = vector.extract_strided_slice %109 {offsets = [0, 0], sizes = [8, 128], strides = [1, 1]} : vector<8x384xf32> to vector<8x128xf32>
    %112 = arith.addf %110, %111 : vector<8x128xf32>
    %113 = arith.negf %112 : vector<8x128xf32>
    %114 = math.exp %113 : vector<8x128xf32>
    %cst_28 = arith.constant 1.000000e+00 : f32
    %115 = vector.broadcast %cst_28 : f32 to vector<8x128xf32>
    %116 = arith.addf %115, %114 : vector<8x128xf32>
    %117 = arith.divf %115, %116 : vector<8x128xf32>
    %118 = vector.extract_strided_slice %105 {offsets = [0, 128], sizes = [8, 128], strides = [1, 1]} : vector<8x384xf32> to vector<8x128xf32>
    %119 = vector.extract_strided_slice %109 {offsets = [0, 128], sizes = [8, 128], strides = [1, 1]} : vector<8x384xf32> to vector<8x128xf32>
    %120 = arith.addf %118, %119 : vector<8x128xf32>
    %121 = arith.negf %120 : vector<8x128xf32>
    %122 = math.exp %121 : vector<8x128xf32>
    %cst_29 = arith.constant 1.000000e+00 : f32
    %123 = vector.broadcast %cst_29 : f32 to vector<8x128xf32>
    %124 = arith.addf %123, %122 : vector<8x128xf32>
    %125 = arith.divf %123, %124 : vector<8x128xf32>
    %126 = vector.extract_strided_slice %105 {offsets = [0, 256], sizes = [8, 128], strides = [1, 1]} : vector<8x384xf32> to vector<8x128xf32>
    %127 = vector.extract_strided_slice %109 {offsets = [0, 256], sizes = [8, 128], strides = [1, 1]} : vector<8x384xf32> to vector<8x128xf32>
    %128 = arith.mulf %117, %127 : vector<8x128xf32>
    %129 = arith.addf %126, %128 : vector<8x128xf32>
    %130 = math.tanh %129 : vector<8x128xf32>
    %cst_30 = arith.constant 1.000000e+00 : f32
    %131 = vector.broadcast %cst_30 : f32 to vector<8x128xf32>
    %132 = arith.subf %131, %125 : vector<8x128xf32>
    %133 = arith.mulf %132, %130 : vector<8x128xf32>
    %134 = arith.mulf %125, %103 : vector<8x128xf32>
    %135 = arith.addf %133, %134 : vector<8x128xf32>
    %c24 = arith.constant 24 : index
    %c0_31 = arith.constant 0 : index
    %136 = vector.load %arg9[%c24, %c0_31] : memref<32x128xf32, #tpu.memory_space<vmem>>, vector<8x128xf32>
    tpu.vector_store %arg9[%c24, %c0_31], %135 {strides = array<i32>} : memref<32x128xf32, #tpu.memory_space<vmem>>, vector<8x128xf32>,
    %c0_32 = arith.constant 0 : index
    %c0_33 = arith.constant 0 : index
    %137 = vector.load %arg9[%c0_32, %c0_33] : memref<32x128xf32, #tpu.memory_space<vmem>>, vector<32x128xf32>
    %138 = arith.truncf %137 : vector<32x128xf32> to vector<32x128xbf16>
    %c0_34 = arith.constant 0 : index
    %c0_35 = arith.constant 0 : index
    %139 = vector.load %arg6[%c0_34, %c0_35] : memref<128x128xbf16, #tpu.memory_space<vmem>>, vector<128x128xbf16>
    %cst_36 = arith.constant dense<0.000000e+00> : vector<32x128xf32>
    %140 = tpu.matmul %138, %139, %cst_36 {dimension_numbers = #tpu.dot_dimension_numbers<[1], [0], [0], [1], [0, 0, 1, 1], [], []>} : vector<32x128xbf16>, vector<128x128xbf16>, vector<32x128xf32> -> vector<32x128xf32>
    %c0_37 = arith.constant 0 : index
    %c0_38 = arith.constant 0 : index
    %141 = vector.load %arg7[%c0_37, %c0_38] : memref<1x128xf32, #tpu.memory_space<vmem>>, vector<1x128xf32>
    %142 = vector.broadcast %141 : vector<1x128xf32> to vector<32x128xf32>
    %143 = arith.addf %140, %142 : vector<32x128xf32>
    %c0_39 = arith.constant 0 : index
    %c0_40 = arith.constant 0 : index
    %144 = vector.load %arg8[%c0_39, %c0_40] : memref<32x128xf32, #tpu.memory_space<vmem>>, vector<32x128xf32>
    tpu.vector_store %arg8[%c0_39, %c0_40], %143 {strides = array<i32>} : memref<32x128xf32, #tpu.memory_space<vmem>>, vector<32x128xf32>,
    return
  }
}

</mosaic_0001>

<llo_original>
// kernel: graph2seq_forward.2
$region0: #{graph2seq_forward.2}
  #allocation0 [shape = 'u32[]', space=smem, size = 0x4, offset = 0x4, fixed_abs, tag = 'smem constant byte address 0x4 - core index']
  #allocation1 [shape = 'u32[144,128]{1,0:T(1,128)}', space=vmem, size = 0x12000, scoped, tag = 'internal scratch']
  %s0 = inlined_call_operand.vmem [shape: f32[8,128], index: 0, kind: input, shape index: {}]
  %s1 = inlined_call_operand.vmem [shape: bf16[128,128], index: 1, kind: input, shape index: {}]
  %s2 = inlined_call_operand.vmem [shape: bf16[128,128], index: 2, kind: input, shape index: {}]
  %s3 = inlined_call_operand.vmem [shape: f32[1,128], index: 3, kind: input, shape index: {}]
  %s4 = inlined_call_operand.vmem [shape: bf16[128,128], index: 4, kind: input, shape index: {}]
  %s5 = inlined_call_operand.vmem [shape: bf16[128,128], index: 5, kind: input, shape index: {}]
  %s6 = inlined_call_operand.vmem [shape: bf16[128,128], index: 6, kind: input, shape index: {}]
  %s7 = inlined_call_operand.vmem [shape: f32[1,128], index: 7, kind: input, shape index: {}]
  %s8 = inlined_call_operand.vmem [shape: f32[8,128], index: 8, kind: output, shape index: {}]
  %s9 = sld [smem:[#allocation0]]
  $region42: #{graph2seq_forward.2} parent=0
    _
  %s11 = ssub.s32 1, %s9
  %s12 = scalar_select 0, %s11, %s9
  // Predicated region
  $region2: #{graph2seq_forward.2} parent=0 // pred_check
    _
  $region3: #{graph2seq_forward.2} parent=0 // pred_check_branch
    %14 = sbr.rel (0) target = $region5
  $region4: #{graph2seq_forward.2} parent=0 // pred_region
    _
  $region5: #{graph2seq_forward.2} parent=0 // pred_fallthru
    _
  // Predicated region
  $region6: #{graph2seq_forward.2} parent=0 // pred_check
    _
  $region7: #{graph2seq_forward.2} parent=0 // pred_check_branch
    %16 = sbr.rel (0) target = $region9
  $region8: #{graph2seq_forward.2} parent=0 // pred_region
    _
  $region9: #{graph2seq_forward.2} parent=0 // pred_fallthru
    _
  // Predicated region
  $region10: #{graph2seq_forward.2} parent=0 // pred_check
    _
  $region11: #{graph2seq_forward.2} parent=0 // pred_check_branch
    %18 = sbr.rel (0) target = $region13
  $region12: #{graph2seq_forward.2} parent=0 // pred_region
    _
  $region13: #{graph2seq_forward.2} parent=0 // pred_fallthru
    _
  // Predicated region
  $region14: #{graph2seq_forward.2} parent=0 // pred_check
    _
  $region15: #{graph2seq_forward.2} parent=0 // pred_check_branch
    %20 = sbr.rel (0) target = $region17
  $region16: #{graph2seq_forward.2} parent=0 // pred_region
    _
  $region17: #{graph2seq_forward.2} parent=0 // pred_fallthru
    _
  // Predicated region
  $region18: #{graph2seq_forward.2} parent=0 // pred_check
    _
  $region19: #{graph2seq_forward.2} parent=0 // pred_check_branch
    %22 = sbr.rel (0) target = $region21
  $region20: #{graph2seq_forward.2} parent=0 // pred_region
    _
  $region21: #{graph2seq_forward.2} parent=0 // pred_fallthru
    _
  // Predicated region
  $region22: #{graph2seq_forward.2} parent=0 // pred_check
    _
  $region23: #{graph2seq_forward.2} parent=0 // pred_check_branch
    %24 = sbr.rel (0) target = $region25
  $region24: #{graph2seq_forward.2} parent=0 // pred_region
    _
  $region25: #{graph2seq_forward.2} parent=0 // pred_fallthru
    _
  // Predicated region
  $region26: #{graph2seq_forward.2} parent=0 // pred_check
    _
  $region27: #{graph2seq_forward.2} parent=0 // pred_check_branch
    %26 = sbr.rel (0) target = $region29
  $region28: #{graph2seq_forward.2} parent=0 // pred_region
    _
  $region29: #{graph2seq_forward.2} parent=0 // pred_fallthru
    _
  // Predicated region
  $region30: #{graph2seq_forward.2} parent=0 // pred_check
    _
  $region31: #{graph2seq_forward.2} parent=0 // pred_check_branch
    %28 = sbr.rel (0) target = $region33
  $region32: #{graph2seq_forward.2} parent=0 // pred_region
    _
  $region33: #{graph2seq_forward.2} parent=0 // pred_fallthru
    _
  %v30 = vld [vmem:[%s0] sm:$0xff]
  %v31 = vpack.c.bf16 %v30, %v30
  %v32 = vld [vmem:[%s4] sm:$0xf]
  %v33 = vld [vmem:[%s4 + $0x4] sm:$0xf]
  %v34 = vld [vmem:[%s4 + $0x8] sm:$0xf]
  %v35 = vld [vmem:[%s4 + $0xc] sm:$0xf]
  %v36 = vld [vmem:[%s4 + $0x10] sm:$0xf]
  %v37 = vld [vmem:[%s4 + $0x14] sm:$0xf]
  %v38 = vld [vmem:[%s4 + $0x18] sm:$0xf]
  %v39 = vld [vmem:[%s4 + $0x1c] sm:$0xf]
  %v40 = vld [vmem:[%s4 + $0x20] sm:$0xf]
  %v41 = vld [vmem:[%s4 + $0x24] sm:$0xf]
  %v42 = vld [vmem:[%s4 + $0x28] sm:$0xf]
  %v43 = vld [vmem:[%s4 + $0x2c] sm:$0xf]
  %v44 = vld [vmem:[%s4 + $0x30] sm:$0xf]
  %v45 = vld [vmem:[%s4 + $0x34] sm:$0xf]
  %v46 = vld [vmem:[%s4 + $0x38] sm:$0xf]
  %v47 = vld [vmem:[%s4 + $0x3c] sm:$0xf]
  %v64 = vunpack.c.l.b16 %v32
  %v65 = vunpack.c.l.b16 %v33
  %v66 = vunpack.c.l.b16 %v34
  %v67 = vunpack.c.l.b16 %v35
  %v68 = vunpack.c.l.b16 %v36
  %v69 = vunpack.c.l.b16 %v37
  %v70 = vunpack.c.l.b16 %v38
  %v71 = vunpack.c.l.b16 %v39
  %v72 = vunpack.c.l.b16 %v40
  %v73 = vunpack.c.l.b16 %v41
  %v74 = vunpack.c.l.b16 %v42
  %v75 = vunpack.c.l.b16 %v43
  %v76 = vunpack.c.l.b16 %v44
  %v77 = vunpack.c.l.b16 %v45
  %v78 = vunpack.c.l.b16 %v46
  %v79 = vunpack.c.l.b16 %v47
  %v80 = vpack.c.b16 %v65, %v64
  %v81 = vpack.c.b16 %v67, %v66
  %v82 = vpack.c.b16 %v69, %v68
  %v83 = vpack.c.b16 %v71, %v70
  %v84 = vpack.c.b16 %v73, %v72
  %v85 = vpack.c.b16 %v75, %v74
  %v86 = vpack.c.b16 %v77, %v76
  %v87 = vpack.c.b16 %v79, %v78
  %96 = vmatprep.subr.bf16.mxu0 0
  %97 = vmatpush1.bf16.msra.mxu0 %v87
  %98 = vmatprep.subr.bf16.mxu0 0
  %99 = vmatpush1.bf16.msra.mxu0 %v86
  %100 = vmatprep.subr.bf16.mxu0 0
  %101 = vmatpush1.bf16.msra.mxu0 %v85
  %102 = vmatprep.subr.bf16.mxu0 0
  %103 = vmatpush1.bf16.msra.mxu0 %v84
  %104 = vmatprep.subr.bf16.mxu0 0
  %105 = vmatpush1.bf16.msra.mxu0 %v83
  %106 = vmatprep.subr.bf16.mxu0 0
  %107 = vmatpush1.bf16.msra.mxu0 %v82
  %108 = vmatprep.subr.bf16.mxu0 0
  %109 = vmatpush1.bf16.msra.mxu0 %v81
  %110 = vmatprep.subr.bf16.mxu0 0
  %111 = vmatpush1.bf16.msra.mxu0 %v80
  %112 = vmatprep.subr.bf16.mxu0 0
  %113 = vmatpush2.bf16.msra.mxu0 0
  %114 = vmatprep.subr.bf16.mxu0 0
  %115 = vmatpush2.bf16.msra.mxu0 0
  %116 = vmatprep.subr.bf16.mxu0 0
  %117 = vmatpush2.bf16.msra.mxu0 0
  %118 = vmatprep.subr.bf16.mxu0 0
  %119 = vmatpush2.bf16.msra.mxu0 0
  %120 = vmatprep.subr.bf16.mxu0 0
  %121 = vmatpush2.bf16.msra.mxu0 0
  %122 = vmatprep.subr.bf16.mxu0 0
  %123 = vmatpush2.bf16.msra.mxu0 0
  %124 = vmatprep.subr.bf16.mxu0 0
  %125 = vmatpush2.bf16.msra.mxu0 0
  %126 = vmatprep.subr.bf16.mxu0 0
  %127 = vmatpush2.bf16.msra.mxu0 0
  %128 = vmatprep.mubr.bf16.mxu0 0
  %129 = vmatmul.mubr.bf16.gmra.mxu0 %v31
  %v130 = vpop.f32.mrf.mxu0
  %v131 = vadd.f32 0.0, %v130
  %v132 = vpop.f32.mrf.mxu0
  %v133 = vpop.f32.mrf.mxu0
  %v134 = vpop.f32.mrf.mxu0
  %135 = vdwg.mxu0
  %v136 = vpack.c.bf16 %v131, %v131
  %v137 = vld [vmem:[%s2] sm:$0xf]
  %v138 = vld [vmem:[%s2 + $0x4] sm:$0xf]
  %v139 = vld [vmem:[%s2 + $0x8] sm:$0xf]
  %v140 = vld [vmem:[%s2 + $0xc] sm:$0xf]
  %v141 = vld [vmem:[%s2 + $0x10] sm:$0xf]
  %v142 = vld [vmem:[%s2 + $0x14] sm:$0xf]
  %v143 = vld [vmem:[%s2 + $0x18] sm:$0xf]
  %v144 = vld [vmem:[%s2 + $0x1c] sm:$0xf]
  %v145 = vld [vmem:[%s2 + $0x20] sm:$0xf]
  %v146 = vld [vmem:[%s2 + $0x24] sm:$0xf]
  %v147 = vld [vmem:[%s2 + $0x28] sm:$0xf]
  %v148 = vld [vmem:[%s2 + $0x2c] sm:$0xf]
  %v149 = vld [vmem:[%s2 + $0x30] sm:$0xf]
  %v150 = vld [vmem:[%s2 + $0x34] sm:$0xf]
  %v151 = vld [vmem:[%s2 + $0x38] sm:$0xf]
  %v152 = vld [vmem:[%s2 + $0x3c] sm:$0xf]
  %v153 = vld [vmem:[%s3] sm:$0x1]
  %v155 = vlaneseq
  %v156 = vshrl.u32 %v155, 7
  %v157 = vsub.s32 0, %v156
  %v158 = vrot.slane %v153, %v157
  %v176 = vunpack.c.l.b16 %v137
  %v177 = vunpack.c.l.b16 %v138
  %v178 = vunpack.c.l.b16 %v139
  %v179 = vunpack.c.l.b16 %v140
  %v180 = vunpack.c.l.b16 %v141
  %v181 = vunpack.c.l.b16 %v142
  %v182 = vunpack.c.l.b16 %v143
  %v183 = vunpack.c.l.b16 %v144
  %v184 = vunpack.c.l.b16 %v145
  %v185 = vunpack.c.l.b16 %v146
  %v186 = vunpack.c.l.b16 %v147
  %v187 = vunpack.c.l.b16 %v148
  %v188 = vunpack.c.l.b16 %v149
  %v189 = vunpack.c.l.b16 %v150
  %v190 = vunpack.c.l.b16 %v151
  %v191 = vunpack.c.l.b16 %v152
  %v192 = vpack.c.b16 %v177, %v176
  %v193 = vpack.c.b16 %v179, %v178
  %v194 = vpack.c.b16 %v181, %v180
  %v195 = vpack.c.b16 %v183, %v182
  %v196 = vpack.c.b16 %v185, %v184
  %v197 = vpack.c.b16 %v187, %v186
  %v198 = vpack.c.b16 %v189, %v188
  %v199 = vpack.c.b16 %v191, %v190
  %208 = vmatprep.subr.bf16.mxu0 0
  %209 = vmatpush1.bf16.msra.mxu0 %v199
  %210 = vmatprep.subr.bf16.mxu0 0
  %211 = vmatpush1.bf16.msra.mxu0 %v198
  %212 = vmatprep.subr.bf16.mxu0 0
  %213 = vmatpush1.bf16.msra.mxu0 %v197
  %214 = vmatprep.subr.bf16.mxu0 0
  %215 = vmatpush1.bf16.msra.mxu0 %v196
  %216 = vmatprep.subr.bf16.mxu0 0
  %217 = vmatpush1.bf16.msra.mxu0 %v195
  %218 = vmatprep.subr.bf16.mxu0 0
  %219 = vmatpush1.bf16.msra.mxu0 %v194
  %220 = vmatprep.subr.bf16.mxu0 0
  %221 = vmatpush1.bf16.msra.mxu0 %v193
  %222 = vmatprep.subr.bf16.mxu0 0
  %223 = vmatpush1.bf16.msra.mxu0 %v192
  %224 = vmatprep.subr.bf16.mxu0 0
  %225 = vmatpush2.bf16.msra.mxu0 0
  %226 = vmatprep.subr.bf16.mxu0 0
  %227 = vmatpush2.bf16.msra.mxu0 0
  %228 = vmatprep.subr.bf16.mxu0 0
  %229 = vmatpush2.bf16.msra.mxu0 0
  %230 = vmatprep.subr.bf16.mxu0 0
  %231 = vmatpush2.bf16.msra.mxu0 0
  %232 = vmatprep.subr.bf16.mxu0 0
  %233 = vmatpush2.bf16.msra.mxu0 0
  %234 = vmatprep.subr.bf16.mxu0 0
  %235 = vmatpush2.bf16.msra.mxu0 0
  %236 = vmatprep.subr.bf16.mxu0 0
  %237 = vmatpush2.bf16.msra.mxu0 0
  %238 = vmatprep.subr.bf16.mxu0 0
  %239 = vmatpush2.bf16.msra.mxu0 0
  %240 = vmatprep.mubr.bf16.mxu0 0
  %241 = vmatmul.mubr.bf16.gmra.mxu0 %v136
  %v242 = vpop.f32.mrf.mxu0
  %v243 = vadd.f32 %v158, %v242
  %v244 = vpop.f32.mrf.mxu0
  %v245 = vpop.f32.mrf.mxu0
  %v246 = vpop.f32.mrf.mxu0
  %247 = vdwg.mxu0
  %248 = vmax.xlane.f32.xlu0 %v243
  %v249 = vpop.xlane.xlu0 %248
  %v250 = vsub.f32 %v243, %v249
  %v251 = vmul.f32 %v250, 1.442695
  %v252 = vpow.pop %v251
  %253 = vadd.xlane.f32.xlu0 %v252
  %v254 = vpop.xlane.xlu0 %253
  %v255 = vpack.c.bf16 %v252, %v252
  %v256 = vld [vmem:[%s1] sm:$0xf]
  %v257 = vld [vmem:[%s1 + $0x4] sm:$0xf]
  %v258 = vld [vmem:[%s1 + $0x8] sm:$0xf]
  %v259 = vld [vmem:[%s1 + $0xc] sm:$0xf]
  %v260 = vld [vmem:[%s1 + $0x10] sm:$0xf]
  %v261 = vld [vmem:[%s1 + $0x14] sm:$0xf]
  %v262 = vld [vmem:[%s1 + $0x18] sm:$0xf]
  %v263 = vld [vmem:[%s1 + $0x1c] sm:$0xf]
  %v264 = vld [vmem:[%s1 + $0x20] sm:$0xf]
  %v265 = vld [vmem:[%s1 + $0x24] sm:$0xf]
  %v266 = vld [vmem:[%s1 + $0x28] sm:$0xf]
  %v267 = vld [vmem:[%s1 + $0x2c] sm:$0xf]
  %v268 = vld [vmem:[%s1 + $0x30] sm:$0xf]
  %v269 = vld [vmem:[%s1 + $0x34] sm:$0xf]
  %v270 = vld [vmem:[%s1 + $0x38] sm:$0xf]
  %v271 = vld [vmem:[%s1 + $0x3c] sm:$0xf]
  %v288 = vunpack.c.l.b16 %v256
  %v289 = vunpack.c.l.b16 %v257
  %v290 = vunpack.c.l.b16 %v258
  %v291 = vunpack.c.l.b16 %v259
  %v292 = vunpack.c.l.b16 %v260
  %v293 = vunpack.c.l.b16 %v261
  %v294 = vunpack.c.l.b16 %v262
  %v295 = vunpack.c.l.b16 %v263
  %v296 = vunpack.c.l.b16 %v264
  %v297 = vunpack.c.l.b16 %v265
  %v298 = vunpack.c.l.b16 %v266
  %v299 = vunpack.c.l.b16 %v267
  %v300 = vunpack.c.l.b16 %v268
  %v301 = vunpack.c.l.b16 %v269
  %v302 = vunpack.c.l.b16 %v270
  %v303 = vunpack.c.l.b16 %v271
  %v304 = vpack.c.b16 %v289, %v288
  %v305 = vpack.c.b16 %v291, %v290
  %v306 = vpack.c.b16 %v293, %v292
  %v307 = vpack.c.b16 %v295, %v294
  %v308 = vpack.c.b16 %v297, %v296
  %v309 = vpack.c.b16 %v299, %v298
  %v310 = vpack.c.b16 %v301, %v300
  %v311 = vpack.c.b16 %v303, %v302
  %320 = vmatprep.subr.bf16.mxu0 0
  %321 = vmatpush1.bf16.msra.mxu0 %v311
  %322 = vmatprep.subr.bf16.mxu0 0
  %323 = vmatpush1.bf16.msra.mxu0 %v310
  %324 = vmatprep.subr.bf16.mxu0 0
  %325 = vmatpush1.bf16.msra.mxu0 %v309
  %326 = vmatprep.subr.bf16.mxu0 0
  %327 = vmatpush1.bf16.msra.mxu0 %v308
  %328 = vmatprep.subr.bf16.mxu0 0
  %329 = vmatpush1.bf16.msra.mxu0 %v307
  %330 = vmatprep.subr.bf16.mxu0 0
  %331 = vmatpush1.bf16.msra.mxu0 %v306
  %332 = vmatprep.subr.bf16.mxu0 0
  %333 = vmatpush1.bf16.msra.mxu0 %v305
  %334 = vmatprep.subr.bf16.mxu0 0
  %335 = vmatpush1.bf16.msra.mxu0 %v304
  %336 = vmatprep.subr.bf16.mxu0 0
  %337 = vmatpush2.bf16.msra.mxu0 0
  %338 = vmatprep.subr.bf16.mxu0 0
  %339 = vmatpush2.bf16.msra.mxu0 0
  %340 = vmatprep.subr.bf16.mxu0 0
  %341 = vmatpush2.bf16.msra.mxu0 0
  %342 = vmatprep.subr.bf16.mxu0 0
  %343 = vmatpush2.bf16.msra.mxu0 0
  %344 = vmatprep.subr.bf16.mxu0 0
  %345 = vmatpush2.bf16.msra.mxu0 0
  %346 = vmatprep.subr.bf16.mxu0 0
  %347 = vmatpush2.bf16.msra.mxu0 0
  %348 = vmatprep.subr.bf16.mxu0 0
  %349 = vmatpush2.bf16.msra.mxu0 0
  %350 = vmatprep.subr.bf16.mxu0 0
  %351 = vmatpush2.bf16.msra.mxu0 0
  %352 = vmatprep.mubr.bf16.mxu0 0
  %353 = vmatmul.mubr.bf16.gmra.mxu0 %v255
  %v354 = vpop.f32.mrf.mxu0
  %v355 = vadd.f32 0.0, %v354
  %v356 = vpop.f32.mrf.mxu0
  %v357 = vpop.f32.mrf.mxu0
  %v358 = vpop.f32.mrf.mxu0
  %359 = vdwg.mxu0
  %v360 = vrcp.pop %v254
  %v361 = vmul.f32 %v355, %v360
  %v362 = vld [vmem:[%s5] sm:$0xf]
  %v363 = vld [vmem:[%s5 + $0x4] sm:$0xf]
  %v364 = vld [vmem:[%s5 + $0x8] sm:$0xf]
  %v365 = vld [vmem:[%s5 + $0xc] sm:$0xf]
  %v366 = vld [vmem:[%s5 + $0x10] sm:$0xf]
  %v367 = vld [vmem:[%s5 + $0x14] sm:$0xf]
  %v368 = vld [vmem:[%s5 + $0x18] sm:$0xf]
  %v369 = vld [vmem:[%s5 + $0x1c] sm:$0xf]
  %v370 = vld [vmem:[%s5 + $0x20] sm:$0xf]
  %v371 = vld [vmem:[%s5 + $0x24] sm:$0xf]
  %v372 = vld [vmem:[%s5 + $0x28] sm:$0xf]
  %v373 = vld [vmem:[%s5 + $0x2c] sm:$0xf]
  %v374 = vld [vmem:[%s5 + $0x30] sm:$0xf]
  %v375 = vld [vmem:[%s5 + $0x34] sm:$0xf]
  %v376 = vld [vmem:[%s5 + $0x38] sm:$0xf]
  %v377 = vld [vmem:[%s5 + $0x3c] sm:$0xf]
  %v378 = vpack.c.bf16 %v361, %v361
  %v379 = vld [vmem:[%s6] sm:$0xf]
  %v380 = vld [vmem:[%s6 + $0x4] sm:$0xf]
  %v381 = vld [vmem:[%s6 + $0x8] sm:$0xf]
  %v382 = vld [vmem:[%s6 + $0xc] sm:$0xf]
  %v383 = vld [vmem:[%s6 + $0x10] sm:$0xf]
  %v384 = vld [vmem:[%s6 + $0x14] sm:$0xf]
  %v385 = vld [vmem:[%s6 + $0x18] sm:$0xf]
  %v386 = vld [vmem:[%s6 + $0x1c] sm:$0xf]
  %v387 = vld [vmem:[%s6 + $0x20] sm:$0xf]
  %v388 = vld [vmem:[%s6 + $0x24] sm:$0xf]
  %v389 = vld [vmem:[%s6 + $0x28] sm:$0xf]
  %v390 = vld [vmem:[%s6 + $0x2c] sm:$0xf]
  %v391 = vld [vmem:[%s6 + $0x30] sm:$0xf]
  %v392 = vld [vmem:[%s6 + $0x34] sm:$0xf]
  %v393 = vld [vmem:[%s6 + $0x38] sm:$0xf]
  %v394 = vld [vmem:[%s6 + $0x3c] sm:$0xf]
  %v411 = vunpack.c.l.b16 %v379
  %v412 = vunpack.c.l.b16 %v380
  %v413 = vunpack.c.l.b16 %v381
  %v414 = vunpack.c.l.b16 %v382
  %v415 = vunpack.c.l.b16 %v383
  %v416 = vunpack.c.l.b16 %v384
  %v417 = vunpack.c.l.b16 %v385
  %v418 = vunpack.c.l.b16 %v386
  %v419 = vunpack.c.l.b16 %v387
  %v420 = vunpack.c.l.b16 %v388
  %v421 = vunpack.c.l.b16 %v389
  %v422 = vunpack.c.l.b16 %v390
  %v423 = vunpack.c.l.b16 %v391
  %v424 = vunpack.c.l.b16 %v392
  %v425 = vunpack.c.l.b16 %v393
  %v426 = vunpack.c.l.b16 %v394
  %v427 = vpack.c.b16 %v412, %v411
  %v428 = vpack.c.b16 %v414, %v413
  %v429 = vpack.c.b16 %v416, %v415
  %v430 = vpack.c.b16 %v418, %v417
  %v431 = vpack.c.b16 %v420, %v419
  %v432 = vpack.c.b16 %v422, %v421
  %v433 = vpack.c.b16 %v424, %v423
  %v434 = vpack.c.b16 %v426, %v425
  %443 = vmatprep.subr.bf16.mxu0 0
  %444 = vmatpush1.bf16.msra.mxu0 %v434
  %445 = vmatprep.subr.bf16.mxu0 0
  %446 = vmatpush1.bf16.msra.mxu0 %v433
  %447 = vmatprep.subr.bf16.mxu0 0
  %448 = vmatpush1.bf16.msra.mxu0 %v432
  %449 = vmatprep.subr.bf16.mxu0 0
  %450 = vmatpush1.bf16.msra.mxu0 %v431
  %451 = vmatprep.subr.bf16.mxu0 0
  %452 = vmatpush1.bf16.msra.mxu0 %v430
  %453 = vmatprep.subr.bf16.mxu0 0
  %454 = vmatpush1.bf16.msra.mxu0 %v429
  %455 = vmatprep.subr.bf16.mxu0 0
  %456 = vmatpush1.bf16.msra.mxu0 %v428
  %457 = vmatprep.subr.bf16.mxu0 0
  %458 = vmatpush1.bf16.msra.mxu0 %v427
  %459 = vmatprep.subr.bf16.mxu0 0
  %460 = vmatpush2.bf16.msra.mxu0 0
  %461 = vmatprep.subr.bf16.mxu0 0
  %462 = vmatpush2.bf16.msra.mxu0 0
  %463 = vmatprep.subr.bf16.mxu0 0
  %464 = vmatpush2.bf16.msra.mxu0 0
  %465 = vmatprep.subr.bf16.mxu0 0
  %466 = vmatpush2.bf16.msra.mxu0 0
  %467 = vmatprep.subr.bf16.mxu0 0
  %468 = vmatpush2.bf16.msra.mxu0 0
  %469 = vmatprep.subr.bf16.mxu0 0
  %470 = vmatpush2.bf16.msra.mxu0 0
  %471 = vmatprep.subr.bf16.mxu0 0
  %472 = vmatpush2.bf16.msra.mxu0 0
  %473 = vmatprep.subr.bf16.mxu0 0
  %474 = vmatpush2.bf16.msra.mxu0 0
  %475 = vmatprep.mubr.bf16.mxu0 0
  %476 = vmatmul.mubr.bf16.gmra.mxu0 %v378
  %v477 = vpop.f32.mrf.mxu0
  %v478 = vadd.f32 0.0, %v477
  %v479 = vpop.f32.mrf.mxu0
  %v480 = vpop.f32.mrf.mxu0
  %v481 = vpop.f32.mrf.mxu0
  %482 = vdwg.mxu0
  %v499 = vunpack.c.l.b16 %v362
  %v500 = vunpack.c.l.b16 %v363
  %v501 = vunpack.c.l.b16 %v364
  %v502 = vunpack.c.l.b16 %v365
  %v503 = vunpack.c.l.b16 %v366
  %v504 = vunpack.c.l.b16 %v367
  %v505 = vunpack.c.l.b16 %v368
  %v506 = vunpack.c.l.b16 %v369
  %v507 = vunpack.c.l.b16 %v370
  %v508 = vunpack.c.l.b16 %v371
  %v509 = vunpack.c.l.b16 %v372
  %v510 = vunpack.c.l.b16 %v373
  %v511 = vunpack.c.l.b16 %v374
  %v512 = vunpack.c.l.b16 %v375
  %v513 = vunpack.c.l.b16 %v376
  %v514 = vunpack.c.l.b16 %v377
  %v515 = vpack.c.b16 %v500, %v499
  %v516 = vpack.c.b16 %v502, %v501
  %v517 = vpack.c.b16 %v504, %v503
  %v518 = vpack.c.b16 %v506, %v505
  %v519 = vpack.c.b16 %v508, %v507
  %v520 = vpack.c.b16 %v510, %v509
  %v521 = vpack.c.b16 %v512, %v511
  %v522 = vpack.c.b16 %v514, %v513
  %531 = vmatprep.subr.bf16.mxu0 0
  %532 = vmatpush1.bf16.msra.mxu0 %v522
  %533 = vmatprep.subr.bf16.mxu0 0
  %534 = vmatpush1.bf16.msra.mxu0 %v521
  %535 = vmatprep.subr.bf16.mxu0 0
  %536 = vmatpush1.bf16.msra.mxu0 %v520
  %537 = vmatprep.subr.bf16.mxu0 0
  %538 = vmatpush1.bf16.msra.mxu0 %v519
  %539 = vmatprep.subr.bf16.mxu0 0
  %540 = vmatpush1.bf16.msra.mxu0 %v518
  %541 = vmatprep.subr.bf16.mxu0 0
  %542 = vmatpush1.bf16.msra.mxu0 %v517
  %543 = vmatprep.subr.bf16.mxu0 0
  %544 = vmatpush1.bf16.msra.mxu0 %v516
  %545 = vmatprep.subr.bf16.mxu0 0
  %546 = vmatpush1.bf16.msra.mxu0 %v515
  %547 = vmatprep.subr.bf16.mxu0 0
  %548 = vmatpush2.bf16.msra.mxu0 0
  %549 = vmatprep.subr.bf16.mxu0 0
  %550 = vmatpush2.bf16.msra.mxu0 0
  %551 = vmatprep.subr.bf16.mxu0 0
  %552 = vmatpush2.bf16.msra.mxu0 0
  %553 = vmatprep.subr.bf16.mxu0 0
  %554 = vmatpush2.bf16.msra.mxu0 0
  %555 = vmatprep.subr.bf16.mxu0 0
  %556 = vmatpush2.bf16.msra.mxu0 0
  %557 = vmatprep.subr.bf16.mxu0 0
  %558 = vmatpush2.bf16.msra.mxu0 0
  %559 = vmatprep.subr.bf16.mxu0 0
  %560 = vmatpush2.bf16.msra.mxu0 0
  %561 = vmatprep.subr.bf16.mxu0 0
  %562 = vmatpush2.bf16.msra.mxu0 0
  %563 = vmatprep.mubr.bf16.mxu0 0
  %564 = vmatmul.mubr.bf16.gmra.mxu0 %v31
  %v565 = vpop.f32.mrf.mxu0
  %v566 = vadd.f32 %v478, %v565
  %v567 = vpop.f32.mrf.mxu0
  %v568 = vpop.f32.mrf.mxu0
  %v569 = vpop.f32.mrf.mxu0
  %570 = vdwg.mxu0
  %v571 = vld [vmem:[%s7] sm:$0x1]
  %v573 = vlaneseq
  %v574 = vshrl.u32 %v573, 7
  %v575 = vsub.s32 0, %v574
  %v576 = vrot.slane %v571, %v575
  %v578 = vadd.f32 %v566, %v576
  %579 = vst [vmem:[%s8] sm:$0xff] %v578
  // Predicated region
  $region34: #{graph2seq_forward.2} parent=0 // pred_check
    _
  $region35: #{graph2seq_forward.2} parent=0 // pred_check_branch
    %581 = sbr.rel (0) target = $region37
  $region36: #{graph2seq_forward.2} parent=0 // pred_region
    _
  $region37: #{graph2seq_forward.2} parent=0 // pred_fallthru
    _
  // Predicated region
  $region38: #{graph2seq_forward.2} parent=0 // pred_check
    _
  $region39: #{graph2seq_forward.2} parent=0 // pred_check_branch
    %583 = sbr.rel (0) target = $region41
  $region40: #{graph2seq_forward.2} parent=0 // pred_region
    _
  $region41: #{graph2seq_forward.2} parent=0 // pred_fallthru
    _

// kernel: graph2seq_forward.3
$region0: #{graph2seq_forward.3}
  #allocation0 [shape = 'u32[]', space=smem, size = 0x4, offset = 0x4, fixed_abs, tag = 'smem constant byte address 0x4 - core index']
  #allocation1 [shape = 'u32[144,128]{1,0:T(1,128)}', space=vmem, size = 0x12000, scoped, tag = 'internal scratch']
  #allocation2 [shape = 'f32[32,128]{1,0:T(8,128)}', space=vmem, size = 0x4000, scoped, tag = 'scratch operand']
  %s0 = inlined_call_operand.vmem [shape: bf16[32,128], index: 0, kind: input, shape index: {}]
  %s1 = inlined_call_operand.vmem [shape: f32[8,128], index: 1, kind: input, shape index: {}]
  %s2 = inlined_call_operand.vmem [shape: bf16[128,384], index: 2, kind: input, shape index: {}]
  %s3 = inlined_call_operand.vmem [shape: bf16[128,384], index: 3, kind: input, shape index: {}]
  %s4 = inlined_call_operand.vmem [shape: f32[1,384], index: 4, kind: input, shape index: {}]
  %s5 = inlined_call_operand.vmem [shape: f32[1,384], index: 5, kind: input, shape index: {}]
  %s6 = inlined_call_operand.vmem [shape: bf16[128,128], index: 6, kind: input, shape index: {}]
  %s7 = inlined_call_operand.vmem [shape: f32[1,128], index: 7, kind: input, shape index: {}]
  %s8 = inlined_call_operand.vmem [shape: f32[32,128], index: 8, kind: output, shape index: {}]
  %s9 = sld [smem:[#allocation0]]
  $region42: #{graph2seq_forward.3} parent=0
    _
  %s11 = ssub.s32 1, %s9
  %s12 = scalar_select 0, %s11, %s9
  // Predicated region
  $region2: #{graph2seq_forward.3} parent=0 // pred_check
    _
  $region3: #{graph2seq_forward.3} parent=0 // pred_check_branch
    %14 = sbr.rel (0) target = $region5
  $region4: #{graph2seq_forward.3} parent=0 // pred_region
    _
  $region5: #{graph2seq_forward.3} parent=0 // pred_fallthru
    _
  // Predicated region
  $region6: #{graph2seq_forward.3} parent=0 // pred_check
    _
  $region7: #{graph2seq_forward.3} parent=0 // pred_check_branch
    %16 = sbr.rel (0) target = $region9
  $region8: #{graph2seq_forward.3} parent=0 // pred_region
    _
  $region9: #{graph2seq_forward.3} parent=0 // pred_fallthru
    _
  // Predicated region
  $region10: #{graph2seq_forward.3} parent=0 // pred_check
    _
  $region11: #{graph2seq_forward.3} parent=0 // pred_check_branch
    %18 = sbr.rel (0) target = $region13
  $region12: #{graph2seq_forward.3} parent=0 // pred_region
    _
  $region13: #{graph2seq_forward.3} parent=0 // pred_fallthru
    _
  // Predicated region
  $region14: #{graph2seq_forward.3} parent=0 // pred_check
    _
  $region15: #{graph2seq_forward.3} parent=0 // pred_check_branch
    %20 = sbr.rel (0) target = $region17
  $region16: #{graph2seq_forward.3} parent=0 // pred_region
    _
  $region17: #{graph2seq_forward.3} parent=0 // pred_fallthru
    _
  // Predicated region
  $region18: #{graph2seq_forward.3} parent=0 // pred_check
    _
  $region19: #{graph2seq_forward.3} parent=0 // pred_check_branch
    %22 = sbr.rel (0) target = $region21
  $region20: #{graph2seq_forward.3} parent=0 // pred_region
    _
  $region21: #{graph2seq_forward.3} parent=0 // pred_fallthru
    _
  // Predicated region
  $region22: #{graph2seq_forward.3} parent=0 // pred_check
    _
  $region23: #{graph2seq_forward.3} parent=0 // pred_check_branch
    %24 = sbr.rel (0) target = $region25
  $region24: #{graph2seq_forward.3} parent=0 // pred_region
    _
  $region25: #{graph2seq_forward.3} parent=0 // pred_fallthru
    _
  // Predicated region
  $region26: #{graph2seq_forward.3} parent=0 // pred_check
    _
  $region27: #{graph2seq_forward.3} parent=0 // pred_check_branch
    %26 = sbr.rel (0) target = $region29
  $region28: #{graph2seq_forward.3} parent=0 // pred_region
    _
  $region29: #{graph2seq_forward.3} parent=0 // pred_fallthru
    _
  // Predicated region
  $region30: #{graph2seq_forward.3} parent=0 // pred_check
    _
  $region31: #{graph2seq_forward.3} parent=0 // pred_check_branch
    %28 = sbr.rel (0) target = $region33
  $region32: #{graph2seq_forward.3} parent=0 // pred_region
    _
  $region33: #{graph2seq_forward.3} parent=0 // pred_fallthru
    _
  %v30 = vld [vmem:[%s0] sm:$0xf]
  %v31 = vld [vmem:[%s0 + $0x4] sm:$0xf]
  %v32 = vld [vmem:[%s0 + $0x8] sm:$0xf]
  %v33 = vld [vmem:[%s0 + $0xc] sm:$0xf]
  %v34 = vld [vmem:[%s2] sm:$0xff]
  %v35 = vld [vmem:[%s2 + $0x8] sm:$0xf]
  %v36 = vld [vmem:[%s2 + $0xc] sm:$0xff]
  %v37 = vld [vmem:[%s2 + $0x14] sm:$0xf]
  %v38 = vld [vmem:[%s2 + $0x18] sm:$0xff]
  %v39 = vld [vmem:[%s2 + $0x20] sm:$0xf]
  %v40 = vld [vmem:[%s2 + $0x24] sm:$0xff]
  %v41 = vld [vmem:[%s2 + $0x2c] sm:$0xf]
  %v42 = vld [vmem:[%s2 + $0x30] sm:$0xff]
  %v43 = vld [vmem:[%s2 + $0x38] sm:$0xf]
  %v44 = vld [vmem:[%s2 + $0x3c] sm:$0xff]
  %v45 = vld [vmem:[%s2 + $0x44] sm:$0xf]
  %v46 = vld [vmem:[%s2 + $0x48] sm:$0xff]
  %v47 = vld [vmem:[%s2 + $0x50] sm:$0xf]
  %v48 = vld [vmem:[%s2 + $0x54] sm:$0xff]
  %v49 = vld [vmem:[%s2 + $0x5c] sm:$0xf]
  %v50 = vld [vmem:[%s2 + $0x60] sm:$0xff]
  %v51 = vld [vmem:[%s2 + $0x68] sm:$0xf]
  %v52 = vld [vmem:[%s2 + $0x6c] sm:$0xff]
  %v53 = vld [vmem:[%s2 + $0x74] sm:$0xf]
  %v54 = vld [vmem:[%s2 + $0x78] sm:$0xff]
  %v55 = vld [vmem:[%s2 + $0x80] sm:$0xf]
  %v56 = vld [vmem:[%s2 + $0x84] sm:$0xff]
  %v57 = vld [vmem:[%s2 + $0x8c] sm:$0xf]
  %v58 = vld [vmem:[%s2 + $0x90] sm:$0xff]
  %v59 = vld [vmem:[%s2 + $0x98] sm:$0xf]
  %v60 = vld [vmem:[%s2 + $0x9c] sm:$0xff]
  %v61 = vld [vmem:[%s2 + $0xa4] sm:$0xf]
  %v62 = vld [vmem:[%s2 + $0xa8] sm:$0xff]
  %v63 = vld [vmem:[%s2 + $0xb0] sm:$0xf]
  %v64 = vld [vmem:[%s2 + $0xb4] sm:$0xff]
  %v65 = vld [vmem:[%s2 + $0xbc] sm:$0xf]
  %v66 = vld [vmem:[%s4] sm:$0x7]
  %v68 = vlaneseq
  %v69 = vshrl.u32 %v68, 7
  %v70 = vsub.s32 0, %v69
  %v71 = vrot.slane %v66, %v70
  %v72 = vlaneseq
  %v73 = vshrl.u32 %v72, 7
  %v74 = vsub.s32 1, %v73
  %v75 = vrot.slane %v66, %v74
  %v76 = vlaneseq
  %v77 = vshrl.u32 %v76, 7
  %v78 = vsub.s32 2, %v77
  %v79 = vrot.slane %v66, %v78
  %v87 = vunpack.c.l.b16 %v30
  %v88 = vunpack.c.l.b16 %v31
  %v89 = vunpack.c.l.b16 %v32
  %v90 = vunpack.c.l.b16 %v33
  %v91 = vpack.c.b16 %v88, %v87
  %v92 = vpack.c.b16 %v90, %v89
  %v127 = vunpack.c.l.b16 %v34
  %v128 = vunpack.c.h.b16 %v34
  %v129 = vunpack.c.l.b16 %v35
  %v130 = vunpack.c.l.b16 %v36
  %v131 = vunpack.c.h.b16 %v36
  %v132 = vunpack.c.l.b16 %v37
  %v133 = vunpack.c.l.b16 %v38
  %v134 = vunpack.c.h.b16 %v38
  %v135 = vunpack.c.l.b16 %v39
  %v136 = vunpack.c.l.b16 %v40
  %v137 = vunpack.c.h.b16 %v40
  %v138 = vunpack.c.l.b16 %v41
  %v139 = vunpack.c.l.b16 %v42
  %v140 = vunpack.c.h.b16 %v42
  %v141 = vunpack.c.l.b16 %v43
  %v142 = vunpack.c.l.b16 %v44
  %v143 = vunpack.c.h.b16 %v44
  %v144 = vunpack.c.l.b16 %v45
  %v145 = vunpack.c.l.b16 %v46
  %v146 = vunpack.c.h.b16 %v46
  %v147 = vunpack.c.l.b16 %v47
  %v148 = vunpack.c.l.b16 %v48
  %v149 = vunpack.c.h.b16 %v48
  %v150 = vunpack.c.l.b16 %v49
  %v151 = vunpack.c.l.b16 %v50
  %v152 = vunpack.c.h.b16 %v50
  %v153 = vunpack.c.l.b16 %v51
  %v154 = vunpack.c.l.b16 %v52
  %v155 = vunpack.c.h.b16 %v52
  %v156 = vunpack.c.l.b16 %v53
  %v157 = vunpack.c.l.b16 %v54
  %v158 = vunpack.c.h.b16 %v54
  %v159 = vunpack.c.l.b16 %v55
  %v160 = vunpack.c.l.b16 %v56
  %v161 = vunpack.c.h.b16 %v56
  %v162 = vunpack.c.l.b16 %v57
  %v163 = vunpack.c.l.b16 %v58
  %v164 = vunpack.c.h.b16 %v58
  %v165 = vunpack.c.l.b16 %v59
  %v166 = vunpack.c.l.b16 %v60
  %v167 = vunpack.c.h.b16 %v60
  %v168 = vunpack.c.l.b16 %v61
  %v169 = vunpack.c.l.b16 %v62
  %v170 = vunpack.c.h.b16 %v62
  %v171 = vunpack.c.l.b16 %v63
  %v172 = vunpack.c.l.b16 %v64
  %v173 = vunpack.c.h.b16 %v64
  %v174 = vunpack.c.l.b16 %v65
  %v175 = vpack.c.b16 %v130, %v127
  %v176 = vpack.c.b16 %v131, %v128
  %v177 = vpack.c.b16 %v132, %v129
  %v178 = vpack.c.b16 %v136, %v133
  %v179 = vpack.c.b16 %v137, %v134
  %v180 = vpack.c.b16 %v138, %v135
  %v181 = vpack.c.b16 %v142, %v139
  %v182 = vpack.c.b16 %v143, %v140
  %v183 = vpack.c.b16 %v144, %v141
  %v184 = vpack.c.b16 %v148, %v145
  %v185 = vpack.c.b16 %v149, %v146
  %v186 = vpack.c.b16 %v150, %v147
  %v187 = vpack.c.b16 %v154, %v151
  %v188 = vpack.c.b16 %v155, %v152
  %v189 = vpack.c.b16 %v156, %v153
  %v190 = vpack.c.b16 %v160, %v157
  %v191 = vpack.c.b16 %v161, %v158
  %v192 = vpack.c.b16 %v162, %v159
  %v193 = vpack.c.b16 %v166, %v163
  %v194 = vpack.c.b16 %v167, %v164
  %v195 = vpack.c.b16 %v168, %v165
  %v196 = vpack.c.b16 %v172, %v169
  %v197 = vpack.c.b16 %v173, %v170
  %v198 = vpack.c.b16 %v174, %v171
  %223 = vmatprep.subr.bf16.mxu0 %v197
  %224 = vmatpush1.bf16.msra.mxu0 %v196
  %225 = vmatprep.subr.bf16.mxu0 %v194
  %226 = vmatpush1.bf16.msra.mxu0 %v193
  %227 = vmatprep.subr.bf16.mxu0 %v191
  %228 = vmatpush1.bf16.msra.mxu0 %v190
  %229 = vmatprep.subr.bf16.mxu0 %v188
  %230 = vmatpush1.bf16.msra.mxu0 %v187
  %231 = vmatprep.subr.bf16.mxu0 %v185
  %232 = vmatpush1.bf16.msra.mxu0 %v184
  %233 = vmatprep.subr.bf16.mxu0 %v182
  %234 = vmatpush1.bf16.msra.mxu0 %v181
  %235 = vmatprep.subr.bf16.mxu0 %v179
  %236 = vmatpush1.bf16.msra.mxu0 %v178
  %237 = vmatprep.subr.bf16.mxu0 %v176
  %238 = vmatpush1.bf16.msra.mxu0 %v175
  %239 = vmatprep.subr.bf16.mxu0 0
  %240 = vmatpush2.bf16.msra.mxu0 0
  %241 = vmatprep.subr.bf16.mxu0 0
  %242 = vmatpush2.bf16.msra.mxu0 0
  %243 = vmatprep.subr.bf16.mxu0 0
  %244 = vmatpush2.bf16.msra.mxu0 0
  %245 = vmatprep.subr.bf16.mxu0 0
  %246 = vmatpush2.bf16.msra.mxu0 0
  %247 = vmatprep.subr.bf16.mxu0 0
  %248 = vmatpush2.bf16.msra.mxu0 0
  %249 = vmatprep.subr.bf16.mxu0 0
  %250 = vmatpush2.bf16.msra.mxu0 0
  %251 = vmatprep.subr.bf16.mxu0 0
  %252 = vmatpush2.bf16.msra.mxu0 0
  %253 = vmatprep.subr.bf16.mxu0 0
  %254 = vmatpush2.bf16.msra.mxu0 0
  %255 = vmatprep.mubr.bf16.mxu0 0
  %256 = vmatmul.mubr.bf16.gmra.mxu0 %v91
  %v257 = vpop.f32.mrf.mxu0
  %v258 = vadd.f32 %v71, %v257
  %v259 = vpop.f32.mrf.mxu0
  %v260 = vadd.f32 %v75, %v259
  %v261 = vpop.f32.mrf.mxu0
  %v262 = vadd.f32 %v71, %v261
  %v263 = vpop.f32.mrf.mxu0
  %v264 = vadd.f32 %v75, %v263
  %265 = vmatprep.mubr.bf16.mxu0 0
  %266 = vmatmul.mubr.bf16.gmra.mxu0 %v92
  %v267 = vpop.f32.mrf.mxu0
  %v268 = vadd.f32 %v71, %v267
  %v269 = vpop.f32.mrf.mxu0
  %v270 = vadd.f32 %v75, %v269
  %v271 = vpop.f32.mrf.mxu0
  %v272 = vadd.f32 %v71, %v271
  %v273 = vpop.f32.mrf.mxu0
  %v274 = vadd.f32 %v75, %v273
  %275 = vdwg.mxu0
  %276 = vmatprep.subr.bf16.mxu0 0
  %277 = vmatpush1.bf16.msra.mxu0 %v198
  %278 = vmatprep.subr.bf16.mxu0 0
  %279 = vmatpush1.bf16.msra.mxu0 %v195
  %280 = vmatprep.subr.bf16.mxu0 0
  %281 = vmatpush1.bf16.msra.mxu0 %v192
  %282 = vmatprep.subr.bf16.mxu0 0
  %283 = vmatpush1.bf16.msra.mxu0 %v189
  %284 = vmatprep.subr.bf16.mxu0 0
  %285 = vmatpush1.bf16.msra.mxu0 %v186
  %286 = vmatprep.subr.bf16.mxu0 0
  %287 = vmatpush1.bf16.msra.mxu0 %v183
  %288 = vmatprep.subr.bf16.mxu0 0
  %289 = vmatpush1.bf16.msra.mxu0 %v180
  %290 = vmatprep.subr.bf16.mxu0 0
  %291 = vmatpush1.bf16.msra.mxu0 %v177
  %292 = vmatprep.subr.bf16.mxu0 0
  %293 = vmatpush2.bf16.msra.mxu0 0
  %294 = vmatprep.subr.bf16.mxu0 0
  %295 = vmatpush2.bf16.msra.mxu0 0
  %296 = vmatprep.subr.bf16.mxu0 0
  %297 = vmatpush2.bf16.msra.mxu0 0
  %298 = vmatprep.subr.bf16.mxu0 0
  %299 = vmatpush2.bf16.msra.mxu0 0
  %300 = vmatprep.subr.bf16.mxu0 0
  %301 = vmatpush2.bf16.msra.mxu0 0
  %302 = vmatprep.subr.bf16.mxu0 0
  %303 = vmatpush2.bf16.msra.mxu0 0
  %304 = vmatprep.subr.bf16.mxu0 0
  %305 = vmatpush2.bf16.msra.mxu0 0
  %306 = vmatprep.subr.bf16.mxu0 0
  %307 = vmatpush2.bf16.msra.mxu0 0
  %308 = vmatprep.mubr.bf16.mxu0 0
  %309 = vmatmul.mubr.bf16.gmra.mxu0 %v91
  %v310 = vpop.f32.mrf.mxu0
  %v311 = vadd.f32 %v79, %v310
  %v312 = vpop.f32.mrf.mxu0
  %v313 = vpop.f32.mrf.mxu0
  %v314 = vadd.f32 %v79, %v313
  %v315 = vpop.f32.mrf.mxu0
  %316 = vmatprep.mubr.bf16.mxu0 0
  %317 = vmatmul.mubr.bf16.gmra.mxu0 %v92
  %v318 = vpop.f32.mrf.mxu0
  %v319 = vadd.f32 %v79, %v318
  %v320 = vpop.f32.mrf.mxu0
  %v321 = vpop.f32.mrf.mxu0
  %v322 = vadd.f32 %v79, %v321
  %v323 = vpop.f32.mrf.mxu0
  %324 = vdwg.mxu0
  %v325 = vld [vmem:[%s1] sm:$0xff]
  %v326 = vld [vmem:[%s3] sm:$0xff]
  %v327 = vld [vmem:[%s3 + $0x8] sm:$0xf]
  %v328 = vld [vmem:[%s3 + $0xc] sm:$0xff]
  %v329 = vld [vmem:[%s3 + $0x14] sm:$0xf]
  %v330 = vld [vmem:[%s3 + $0x18] sm:$0xff]
  %v331 = vld [vmem:[%s3 + $0x20] sm:$0xf]
  %v332 = vld [vmem:[%s3 + $0x24] sm:$0xff]
  %v333 = vld [vmem:[%s3 + $0x2c] sm:$0xf]
  %v334 = vld [vmem:[%s3 + $0x30] sm:$0xff]
  %v335 = vld [vmem:[%s3 + $0x38] sm:$0xf]
  %v336 = vld [vmem:[%s3 + $0x3c] sm:$0xff]
  %v337 = vld [vmem:[%s3 + $0x44] sm:$0xf]
  %v338 = vld [vmem:[%s3 + $0x48] sm:$0xff]
  %v339 = vld [vmem:[%s3 + $0x50] sm:$0xf]
  %v340 = vld [vmem:[%s3 + $0x54] sm:$0xff]
  %v341 = vld [vmem:[%s3 + $0x5c] sm:$0xf]
  %v342 = vld [vmem:[%s3 + $0x60] sm:$0xff]
  %v343 = vld [vmem:[%s3 + $0x68] sm:$0xf]
  %v344 = vld [vmem:[%s3 + $0x6c] sm:$0xff]
  %v345 = vld [vmem:[%s3 + $0x74] sm:$0xf]
  %v346 = vld [vmem:[%s3 + $0x78] sm:$0xff]
  %v347 = vld [vmem:[%s3 + $0x80] sm:$0xf]
  %v348 = vld [vmem:[%s3 + $0x84] sm:$0xff]
  %v349 = vld [vmem:[%s3 + $0x8c] sm:$0xf]
  %v350 = vld [vmem:[%s3 + $0x90] sm:$0xff]
  %v351 = vld [vmem:[%s3 + $0x98] sm:$0xf]
  %v352 = vld [vmem:[%s3 + $0x9c] sm:$0xff]
  %v353 = vld [vmem:[%s3 + $0xa4] sm:$0xf]
  %v354 = vld [vmem:[%s3 + $0xa8] sm:$0xff]
  %v355 = vld [vmem:[%s3 + $0xb0] sm:$0xf]
  %v356 = vld [vmem:[%s3 + $0xb4] sm:$0xff]
  %v357 = vld [vmem:[%s3 + $0xbc] sm:$0xf]
  %v358 = vld [vmem:[%s5] sm:$0x7]
  %v359 = vpack.c.bf16 %v325, %v325
  %v361 = vlaneseq
  %v362 = vshrl.u32 %v361, 7
  %v363 = vsub.s32 0, %v362
  %v364 = vrot.slane %v358, %v363
  %v365 = vlaneseq
  %v366 = vshrl.u32 %v365, 7
  %v367 = vsub.s32 1, %v366
  %v368 = vrot.slane %v358, %v367
  %v369 = vlaneseq
  %v370 = vshrl.u32 %v369, 7
  %v371 = vsub.s32 2, %v370
  %v372 = vrot.slane %v358, %v371
  %v408 = vunpack.c.l.b16 %v326
  %v409 = vunpack.c.h.b16 %v326
  %v410 = vunpack.c.l.b16 %v327
  %v411 = vunpack.c.l.b16 %v328
  %v412 = vunpack.c.h.b16 %v328
  %v413 = vunpack.c.l.b16 %v329
  %v414 = vunpack.c.l.b16 %v330
  %v415 = vunpack.c.h.b16 %v330
  %v416 = vunpack.c.l.b16 %v331
  %v417 = vunpack.c.l.b16 %v332
  %v418 = vunpack.c.h.b16 %v332
  %v419 = vunpack.c.l.b16 %v333
  %v420 = vunpack.c.l.b16 %v334
  %v421 = vunpack.c.h.b16 %v334
  %v422 = vunpack.c.l.b16 %v335
  %v423 = vunpack.c.l.b16 %v336
  %v424 = vunpack.c.h.b16 %v336
  %v425 = vunpack.c.l.b16 %v337
  %v426 = vunpack.c.l.b16 %v338
  %v427 = vunpack.c.h.b16 %v338
  %v428 = vunpack.c.l.b16 %v339
  %v429 = vunpack.c.l.b16 %v340
  %v430 = vunpack.c.h.b16 %v340
  %v431 = vunpack.c.l.b16 %v341
  %v432 = vunpack.c.l.b16 %v342
  %v433 = vunpack.c.h.b16 %v342
  %v434 = vunpack.c.l.b16 %v343
  %v435 = vunpack.c.l.b16 %v344
  %v436 = vunpack.c.h.b16 %v344
  %v437 = vunpack.c.l.b16 %v345
  %v438 = vunpack.c.l.b16 %v346
  %v439 = vunpack.c.h.b16 %v346
  %v440 = vunpack.c.l.b16 %v347
  %v441 = vunpack.c.l.b16 %v348
  %v442 = vunpack.c.h.b16 %v348
  %v443 = vunpack.c.l.b16 %v349
  %v444 = vunpack.c.l.b16 %v350
  %v445 = vunpack.c.h.b16 %v350
  %v446 = vunpack.c.l.b16 %v351
  %v447 = vunpack.c.l.b16 %v352
  %v448 = vunpack.c.h.b16 %v352
  %v449 = vunpack.c.l.b16 %v353
  %v450 = vunpack.c.l.b16 %v354
  %v451 = vunpack.c.h.b16 %v354
  %v452 = vunpack.c.l.b16 %v355
  %v453 = vunpack.c.l.b16 %v356
  %v454 = vunpack.c.h.b16 %v356
  %v455 = vunpack.c.l.b16 %v357
  %v456 = vpack.c.b16 %v411, %v408
  %v457 = vpack.c.b16 %v412, %v409
  %v458 = vpack.c.b16 %v413, %v410
  %v459 = vpack.c.b16 %v417, %v414
  %v460 = vpack.c.b16 %v418, %v415
  %v461 = vpack.c.b16 %v419, %v416
  %v462 = vpack.c.b16 %v423, %v420
  %v463 = vpack.c.b16 %v424, %v421
  %v464 = vpack.c.b16 %v425, %v422
  %v465 = vpack.c.b16 %v429, %v426
  %v466 = vpack.c.b16 %v430, %v427
  %v467 = vpack.c.b16 %v431, %v428
  %v468 = vpack.c.b16 %v435, %v432
  %v469 = vpack.c.b16 %v436, %v433
  %v470 = vpack.c.b16 %v437, %v434
  %v471 = vpack.c.b16 %v441, %v438
  %v472 = vpack.c.b16 %v442, %v439
  %v473 = vpack.c.b16 %v443, %v440
  %v474 = vpack.c.b16 %v447, %v444
  %v475 = vpack.c.b16 %v448, %v445
  %v476 = vpack.c.b16 %v449, %v446
  %v477 = vpack.c.b16 %v453, %v450
  %v478 = vpack.c.b16 %v454, %v451
  %v479 = vpack.c.b16 %v455, %v452
  %504 = vmatprep.subr.bf16.mxu0 %v478
  %505 = vmatpush1.bf16.msra.mxu0 %v477
  %506 = vmatprep.subr.bf16.mxu0 %v475
  %507 = vmatpush1.bf16.msra.mxu0 %v474
  %508 = vmatprep.subr.bf16.mxu0 %v472
  %509 = vmatpush1.bf16.msra.mxu0 %v471
  %510 = vmatprep.subr.bf16.mxu0 %v469
  %511 = vmatpush1.bf16.msra.mxu0 %v468
  %512 = vmatprep.subr.bf16.mxu0 %v466
  %513 = vmatpush1.bf16.msra.mxu0 %v465
  %514 = vmatprep.subr.bf16.mxu0 %v463
  %515 = vmatpush1.bf16.msra.mxu0 %v462
  %516 = vmatprep.subr.bf16.mxu0 %v460
  %517 = vmatpush1.bf16.msra.mxu0 %v459
  %518 = vmatprep.subr.bf16.mxu0 %v457
  %519 = vmatpush1.bf16.msra.mxu0 %v456
  %520 = vmatprep.subr.bf16.mxu0 0
  %521 = vmatpush2.bf16.msra.mxu0 0
  %522 = vmatprep.subr.bf16.mxu0 0
  %523 = vmatpush2.bf16.msra.mxu0 0
  %524 = vmatprep.subr.bf16.mxu0 0
  %525 = vmatpush2.bf16.msra.mxu0 0
  %526 = vmatprep.subr.bf16.mxu0 0
  %527 = vmatpush2.bf16.msra.mxu0 0
  %528 = vmatprep.subr.bf16.mxu0 0
  %529 = vmatpush2.bf16.msra.mxu0 0
  %530 = vmatprep.subr.bf16.mxu0 0
  %531 = vmatpush2.bf16.msra.mxu0 0
  %532 = vmatprep.subr.bf16.mxu0 0
  %533 = vmatpush2.bf16.msra.mxu0 0
  %534 = vmatprep.subr.bf16.mxu0 0
  %535 = vmatpush2.bf16.msra.mxu0 0
  %536 = vmatprep.mubr.bf16.mxu0 0
  %537 = vmatmul.mubr.bf16.gmra.mxu0 %v359
  %v538 = vpop.f32.mrf.mxu0
  %v539 = vadd.f32 %v364, %v538
  %v540 = vpop.f32.mrf.mxu0
  %v541 = vadd.f32 %v368, %v540
  %v542 = vpop.f32.mrf.mxu0
  %v543 = vpop.f32.mrf.mxu0
  %544 = vdwg.mxu0
  %545 = vmatprep.subr.bf16.mxu0 0
  %546 = vmatpush1.bf16.msra.mxu0 %v479
  %547 = vmatprep.subr.bf16.mxu0 0
  %548 = vmatpush1.bf16.msra.mxu0 %v476
  %549 = vmatprep.subr.bf16.mxu0 0
  %550 = vmatpush1.bf16.msra.mxu0 %v473
  %551 = vmatprep.subr.bf16.mxu0 0
  %552 = vmatpush1.bf16.msra.mxu0 %v470
  %553 = vmatprep.subr.bf16.mxu0 0
  %554 = vmatpush1.bf16.msra.mxu0 %v467
  %555 = vmatprep.subr.bf16.mxu0 0
  %556 = vmatpush1.bf16.msra.mxu0 %v464
  %557 = vmatprep.subr.bf16.mxu0 0
  %558 = vmatpush1.bf16.msra.mxu0 %v461
  %559 = vmatprep.subr.bf16.mxu0 0
  %560 = vmatpush1.bf16.msra.mxu0 %v458
  %561 = vmatprep.subr.bf16.mxu0 0
  %562 = vmatpush2.bf16.msra.mxu0 0
  %563 = vmatprep.subr.bf16.mxu0 0
  %564 = vmatpush2.bf16.msra.mxu0 0
  %565 = vmatprep.subr.bf16.mxu0 0
  %566 = vmatpush2.bf16.msra.mxu0 0
  %567 = vmatprep.subr.bf16.mxu0 0
  %568 = vmatpush2.bf16.msra.mxu0 0
  %569 = vmatprep.subr.bf16.mxu0 0
  %570 = vmatpush2.bf16.msra.mxu0 0
  %571 = vmatprep.subr.bf16.mxu0 0
  %572 = vmatpush2.bf16.msra.mxu0 0
  %573 = vmatprep.subr.bf16.mxu0 0
  %574 = vmatpush2.bf16.msra.mxu0 0
  %575 = vmatprep.subr.bf16.mxu0 0
  %576 = vmatpush2.bf16.msra.mxu0 0
  %577 = vmatprep.mubr.bf16.mxu0 0
  %578 = vmatmul.mubr.bf16.gmra.mxu0 %v359
  %v579 = vpop.f32.mrf.mxu0
  %v580 = vadd.f32 %v372, %v579
  %v581 = vpop.f32.mrf.mxu0
  %v582 = vpop.f32.mrf.mxu0
  %v583 = vpop.f32.mrf.mxu0
  %584 = vdwg.mxu0
  %v585 = vadd.f32 %v258, %v539
  %v586 = vxor.u32 %v585, 2147483648
  %v587 = vmul.f32 %v586, 1.442695
  %v588 = vpow.pop %v587
  %v589 = vadd.f32 %v588, 1.0
  %v590 = vrcp.pop %v589
  %v591 = vmul.f32 1.0, %v590
  %v592 = vadd.f32 %v260, %v541
  %v593 = vxor.u32 %v592, 2147483648
  %v594 = vmul.f32 %v593, 1.442695
  %v595 = vpow.pop %v594
  %v596 = vadd.f32 %v595, 1.0
  %v597 = vrcp.pop %v596
  %v598 = vmul.f32 1.0, %v597
  %v599 = vmul.f32 %v591, %v580
  %v600 = vadd.f32 %v311, %v599
  %v601 = vtanh.pop %v600
  %v602 = vsub.f32 1.0, %v598
  %v603 = vmul.f32 %v602, %v601
  %v604 = vmul.f32 %v598, %v325
  %v605 = vadd.f32 %v603, %v604
  %606 = vst [vmem:[#allocation2] sm:$0xff] %v605
  %v607 = vpack.c.bf16 %v605, %v605
  %608 = vmatprep.subr.bf16.mxu0 %v478
  %609 = vmatpush1.bf16.msra.mxu0 %v477
  %610 = vmatprep.subr.bf16.mxu0 %v475
  %611 = vmatpush1.bf16.msra.mxu0 %v474
  %612 = vmatprep.subr.bf16.mxu0 %v472
  %613 = vmatpush1.bf16.msra.mxu0 %v471
  %614 = vmatprep.subr.bf16.mxu0 %v469
  %615 = vmatpush1.bf16.msra.mxu0 %v468
  %616 = vmatprep.subr.bf16.mxu0 %v466
  %617 = vmatpush1.bf16.msra.mxu0 %v465
  %618 = vmatprep.subr.bf16.mxu0 %v463
  %619 = vmatpush1.bf16.msra.mxu0 %v462
  %620 = vmatprep.subr.bf16.mxu0 %v460
  %621 = vmatpush1.bf16.msra.mxu0 %v459
  %622 = vmatprep.subr.bf16.mxu0 %v457
  %623 = vmatpush1.bf16.msra.mxu0 %v456
  %624 = vmatprep.subr.bf16.mxu0 0
  %625 = vmatpush2.bf16.msra.mxu0 0
  %626 = vmatprep.subr.bf16.mxu0 0
  %627 = vmatpush2.bf16.msra.mxu0 0
  %628 = vmatprep.subr.bf16.mxu0 0
  %629 = vmatpush2.bf16.msra.mxu0 0
  %630 = vmatprep.subr.bf16.mxu0 0
  %631 = vmatpush2.bf16.msra.mxu0 0
  %632 = vmatprep.subr.bf16.mxu0 0
  %633 = vmatpush2.bf16.msra.mxu0 0
  %634 = vmatprep.subr.bf16.mxu0 0
  %635 = vmatpush2.bf16.msra.mxu0 0
  %636 = vmatprep.subr.bf16.mxu0 0
  %637 = vmatpush2.bf16.msra.mxu0 0
  %638 = vmatprep.subr.bf16.mxu0 0
  %639 = vmatpush2.bf16.msra.mxu0 0
  %640 = vmatprep.mubr.bf16.mxu0 0
  %641 = vmatmul.mubr.bf16.gmra.mxu0 %v607
  %v642 = vpop.f32.mrf.mxu0
  %v643 = vadd.f32 %v364, %v642
  %v644 = vpop.f32.mrf.mxu0
  %v645 = vadd.f32 %v368, %v644
  %v646 = vpop.f32.mrf.mxu0
  %v647 = vpop.f32.mrf.mxu0
  %648 = vdwg.mxu0
  %649 = vmatprep.subr.bf16.mxu0 0
  %650 = vmatpush1.bf16.msra.mxu0 %v479
  %651 = vmatprep.subr.bf16.mxu0 0
  %652 = vmatpush1.bf16.msra.mxu0 %v476
  %653 = vmatprep.subr.bf16.mxu0 0
  %654 = vmatpush1.bf16.msra.mxu0 %v473
  %655 = vmatprep.subr.bf16.mxu0 0
  %656 = vmatpush1.bf16.msra.mxu0 %v470
  %657 = vmatprep.subr.bf16.mxu0 0
  %658 = vmatpush1.bf16.msra.mxu0 %v467
  %659 = vmatprep.subr.bf16.mxu0 0
  %660 = vmatpush1.bf16.msra.mxu0 %v464
  %661 = vmatprep.subr.bf16.mxu0 0
  %662 = vmatpush1.bf16.msra.mxu0 %v461
  %663 = vmatprep.subr.bf16.mxu0 0
  %664 = vmatpush1.bf16.msra.mxu0 %v458
  %665 = vmatprep.subr.bf16.mxu0 0
  %666 = vmatpush2.bf16.msra.mxu0 0
  %667 = vmatprep.subr.bf16.mxu0 0
  %668 = vmatpush2.bf16.msra.mxu0 0
  %669 = vmatprep.subr.bf16.mxu0 0
  %670 = vmatpush2.bf16.msra.mxu0 0
  %671 = vmatprep.subr.bf16.mxu0 0
  %672 = vmatpush2.bf16.msra.mxu0 0
  %673 = vmatprep.subr.bf16.mxu0 0
  %674 = vmatpush2.bf16.msra.mxu0 0
  %675 = vmatprep.subr.bf16.mxu0 0
  %676 = vmatpush2.bf16.msra.mxu0 0
  %677 = vmatprep.subr.bf16.mxu0 0
  %678 = vmatpush2.bf16.msra.mxu0 0
  %679 = vmatprep.subr.bf16.mxu0 0
  %680 = vmatpush2.bf16.msra.mxu0 0
  %681 = vmatprep.mubr.bf16.mxu0 0
  %682 = vmatmul.mubr.bf16.gmra.mxu0 %v607
  %v683 = vpop.f32.mrf.mxu0
  %v684 = vadd.f32 %v372, %v683
  %v685 = vpop.f32.mrf.mxu0
  %v686 = vpop.f32.mrf.mxu0
  %v687 = vpop.f32.mrf.mxu0
  %688 = vdwg.mxu0
  %v689 = vadd.f32 %v262, %v643
  %v690 = vxor.u32 %v689, 2147483648
  %v691 = vmul.f32 %v690, 1.442695
  %v692 = vpow.pop %v691
  %v693 = vadd.f32 %v692, 1.0
  %v694 = vrcp.pop %v693
  %v695 = vmul.f32 1.0, %v694
  %v696 = vadd.f32 %v264, %v645
  %v697 = vxor.u32 %v696, 2147483648
  %v698 = vmul.f32 %v697, 1.442695
  %v699 = vpow.pop %v698
  %v700 = vadd.f32 %v699, 1.0
  %v701 = vrcp.pop %v700
  %v702 = vmul.f32 1.0, %v701
  %v703 = vmul.f32 %v695, %v684
  %v704 = vadd.f32 %v314, %v703
  %v705 = vtanh.pop %v704
  %v706 = vsub.f32 1.0, %v702
  %v707 = vmul.f32 %v706, %v705
  %v708 = vmul.f32 %v702, %v605
  %v709 = vadd.f32 %v707, %v708
  %710 = vst [vmem:[#allocation2 + $0x8] sm:$0xff] %v709
  %v711 = vpack.c.bf16 %v709, %v709
  %712 = vmatprep.subr.bf16.mxu0 %v478
  %713 = vmatpush1.bf16.msra.mxu0 %v477
  %714 = vmatprep.subr.bf16.mxu0 %v475
  %715 = vmatpush1.bf16.msra.mxu0 %v474
  %716 = vmatprep.subr.bf16.mxu0 %v472
  %717 = vmatpush1.bf16.msra.mxu0 %v471
  %718 = vmatprep.subr.bf16.mxu0 %v469
  %719 = vmatpush1.bf16.msra.mxu0 %v468
  %720 = vmatprep.subr.bf16.mxu0 %v466
  %721 = vmatpush1.bf16.msra.mxu0 %v465
  %722 = vmatprep.subr.bf16.mxu0 %v463
  %723 = vmatpush1.bf16.msra.mxu0 %v462
  %724 = vmatprep.subr.bf16.mxu0 %v460
  %725 = vmatpush1.bf16.msra.mxu0 %v459
  %726 = vmatprep.subr.bf16.mxu0 %v457
  %727 = vmatpush1.bf16.msra.mxu0 %v456
  %728 = vmatprep.subr.bf16.mxu0 0
  %729 = vmatpush2.bf16.msra.mxu0 0
  %730 = vmatprep.subr.bf16.mxu0 0
  %731 = vmatpush2.bf16.msra.mxu0 0
  %732 = vmatprep.subr.bf16.mxu0 0
  %733 = vmatpush2.bf16.msra.mxu0 0
  %734 = vmatprep.subr.bf16.mxu0 0
  %735 = vmatpush2.bf16.msra.mxu0 0
  %736 = vmatprep.subr.bf16.mxu0 0
  %737 = vmatpush2.bf16.msra.mxu0 0
  %738 = vmatprep.subr.bf16.mxu0 0
  %739 = vmatpush2.bf16.msra.mxu0 0
  %740 = vmatprep.subr.bf16.mxu0 0
  %741 = vmatpush2.bf16.msra.mxu0 0
  %742 = vmatprep.subr.bf16.mxu0 0
  %743 = vmatpush2.bf16.msra.mxu0 0
  %744 = vmatprep.mubr.bf16.mxu0 0
  %745 = vmatmul.mubr.bf16.gmra.mxu0 %v711
  %v746 = vpop.f32.mrf.mxu0
  %v747 = vadd.f32 %v364, %v746
  %v748 = vpop.f32.mrf.mxu0
  %v749 = vadd.f32 %v368, %v748
  %v750 = vpop.f32.mrf.mxu0
  %v751 = vpop.f32.mrf.mxu0
  %752 = vdwg.mxu0
  %753 = vmatprep.subr.bf16.mxu0 0
  %754 = vmatpush1.bf16.msra.mxu0 %v479
  %755 = vmatprep.subr.bf16.mxu0 0
  %756 = vmatpush1.bf16.msra.mxu0 %v476
  %757 = vmatprep.subr.bf16.mxu0 0
  %758 = vmatpush1.bf16.msra.mxu0 %v473
  %759 = vmatprep.subr.bf16.mxu0 0
  %760 = vmatpush1.bf16.msra.mxu0 %v470
  %761 = vmatprep.subr.bf16.mxu0 0
  %762 = vmatpush1.bf16.msra.mxu0 %v467
  %763 = vmatprep.subr.bf16.mxu0 0
  %764 = vmatpush1.bf16.msra.mxu0 %v464
  %765 = vmatprep.subr.bf16.mxu0 0
  %766 = vmatpush1.bf16.msra.mxu0 %v461
  %767 = vmatprep.subr.bf16.mxu0 0
  %768 = vmatpush1.bf16.msra.mxu0 %v458
  %769 = vmatprep.subr.bf16.mxu0 0
  %770 = vmatpush2.bf16.msra.mxu0 0
  %771 = vmatprep.subr.bf16.mxu0 0
  %772 = vmatpush2.bf16.msra.mxu0 0
  %773 = vmatprep.subr.bf16.mxu0 0
  %774 = vmatpush2.bf16.msra.mxu0 0
  %775 = vmatprep.subr.bf16.mxu0 0
  %776 = vmatpush2.bf16.msra.mxu0 0
  %777 = vmatprep.subr.bf16.mxu0 0
  %778 = vmatpush2.bf16.msra.mxu0 0
  %779 = vmatprep.subr.bf16.mxu0 0
  %780 = vmatpush2.bf16.msra.mxu0 0
  %781 = vmatprep.subr.bf16.mxu0 0
  %782 = vmatpush2.bf16.msra.mxu0 0
  %783 = vmatprep.subr.bf16.mxu0 0
  %784 = vmatpush2.bf16.msra.mxu0 0
  %785 = vmatprep.mubr.bf16.mxu0 0
  %786 = vmatmul.mubr.bf16.gmra.mxu0 %v711
  %v787 = vpop.f32.mrf.mxu0
  %v788 = vadd.f32 %v372, %v787
  %v789 = vpop.f32.mrf.mxu0
  %v790 = vpop.f32.mrf.mxu0
  %v791 = vpop.f32.mrf.mxu0
  %792 = vdwg.mxu0
  %v793 = vadd.f32 %v268, %v747
  %v794 = vxor.u32 %v793, 2147483648
  %v795 = vmul.f32 %v794, 1.442695
  %v796 = vpow.pop %v795
  %v797 = vadd.f32 %v796, 1.0
  %v798 = vrcp.pop %v797
  %v799 = vmul.f32 1.0, %v798
  %v800 = vadd.f32 %v270, %v749
  %v801 = vxor.u32 %v800, 2147483648
  %v802 = vmul.f32 %v801, 1.442695
  %v803 = vpow.pop %v802
  %v804 = vadd.f32 %v803, 1.0
  %v805 = vrcp.pop %v804
  %v806 = vmul.f32 1.0, %v805
  %v807 = vmul.f32 %v799, %v788
  %v808 = vadd.f32 %v319, %v807
  %v809 = vtanh.pop %v808
  %v810 = vsub.f32 1.0, %v806
  %v811 = vmul.f32 %v810, %v809
  %v812 = vmul.f32 %v806, %v709
  %v813 = vadd.f32 %v811, %v812
  %814 = vst [vmem:[#allocation2 + $0x10] sm:$0xff] %v813
  %v815 = vpack.c.bf16 %v813, %v813
  %816 = vmatprep.subr.bf16.mxu0 %v478
  %817 = vmatpush1.bf16.msra.mxu0 %v477
  %818 = vmatprep.subr.bf16.mxu0 %v475
  %819 = vmatpush1.bf16.msra.mxu0 %v474
  %820 = vmatprep.subr.bf16.mxu0 %v472
  %821 = vmatpush1.bf16.msra.mxu0 %v471
  %822 = vmatprep.subr.bf16.mxu0 %v469
  %823 = vmatpush1.bf16.msra.mxu0 %v468
  %824 = vmatprep.subr.bf16.mxu0 %v466
  %825 = vmatpush1.bf16.msra.mxu0 %v465
  %826 = vmatprep.subr.bf16.mxu0 %v463
  %827 = vmatpush1.bf16.msra.mxu0 %v462
  %828 = vmatprep.subr.bf16.mxu0 %v460
  %829 = vmatpush1.bf16.msra.mxu0 %v459
  %830 = vmatprep.subr.bf16.mxu0 %v457
  %831 = vmatpush1.bf16.msra.mxu0 %v456
  %832 = vmatprep.subr.bf16.mxu0 0
  %833 = vmatpush2.bf16.msra.mxu0 0
  %834 = vmatprep.subr.bf16.mxu0 0
  %835 = vmatpush2.bf16.msra.mxu0 0
  %836 = vmatprep.subr.bf16.mxu0 0
  %837 = vmatpush2.bf16.msra.mxu0 0
  %838 = vmatprep.subr.bf16.mxu0 0
  %839 = vmatpush2.bf16.msra.mxu0 0
  %840 = vmatprep.subr.bf16.mxu0 0
  %841 = vmatpush2.bf16.msra.mxu0 0
  %842 = vmatprep.subr.bf16.mxu0 0
  %843 = vmatpush2.bf16.msra.mxu0 0
  %844 = vmatprep.subr.bf16.mxu0 0
  %845 = vmatpush2.bf16.msra.mxu0 0
  %846 = vmatprep.subr.bf16.mxu0 0
  %847 = vmatpush2.bf16.msra.mxu0 0
  %848 = vmatprep.mubr.bf16.mxu0 0
  %849 = vmatmul.mubr.bf16.gmra.mxu0 %v815
  %v850 = vpop.f32.mrf.mxu0
  %v851 = vadd.f32 %v364, %v850
  %v852 = vpop.f32.mrf.mxu0
  %v853 = vadd.f32 %v368, %v852
  %v854 = vpop.f32.mrf.mxu0
  %v855 = vpop.f32.mrf.mxu0
  %856 = vdwg.mxu0
  %857 = vmatprep.subr.bf16.mxu0 0
  %858 = vmatpush1.bf16.msra.mxu0 %v479
  %859 = vmatprep.subr.bf16.mxu0 0
  %860 = vmatpush1.bf16.msra.mxu0 %v476
  %861 = vmatprep.subr.bf16.mxu0 0
  %862 = vmatpush1.bf16.msra.mxu0 %v473
  %863 = vmatprep.subr.bf16.mxu0 0
  %864 = vmatpush1.bf16.msra.mxu0 %v470
  %865 = vmatprep.subr.bf16.mxu0 0
  %866 = vmatpush1.bf16.msra.mxu0 %v467
  %867 = vmatprep.subr.bf16.mxu0 0
  %868 = vmatpush1.bf16.msra.mxu0 %v464
  %869 = vmatprep.subr.bf16.mxu0 0
  %870 = vmatpush1.bf16.msra.mxu0 %v461
  %871 = vmatprep.subr.bf16.mxu0 0
  %872 = vmatpush1.bf16.msra.mxu0 %v458
  %873 = vmatprep.subr.bf16.mxu0 0
  %874 = vmatpush2.bf16.msra.mxu0 0
  %875 = vmatprep.subr.bf16.mxu0 0
  %876 = vmatpush2.bf16.msra.mxu0 0
  %877 = vmatprep.subr.bf16.mxu0 0
  %878 = vmatpush2.bf16.msra.mxu0 0
  %879 = vmatprep.subr.bf16.mxu0 0
  %880 = vmatpush2.bf16.msra.mxu0 0
  %881 = vmatprep.subr.bf16.mxu0 0
  %882 = vmatpush2.bf16.msra.mxu0 0
  %883 = vmatprep.subr.bf16.mxu0 0
  %884 = vmatpush2.bf16.msra.mxu0 0
  %885 = vmatprep.subr.bf16.mxu0 0
  %886 = vmatpush2.bf16.msra.mxu0 0
  %887 = vmatprep.subr.bf16.mxu0 0
  %888 = vmatpush2.bf16.msra.mxu0 0
  %889 = vmatprep.mubr.bf16.mxu0 0
  %890 = vmatmul.mubr.bf16.gmra.mxu0 %v815
  %v891 = vpop.f32.mrf.mxu0
  %v892 = vadd.f32 %v372, %v891
  %v893 = vpop.f32.mrf.mxu0
  %v894 = vpop.f32.mrf.mxu0
  %v895 = vpop.f32.mrf.mxu0
  %896 = vdwg.mxu0
  %v897 = vadd.f32 %v272, %v851
  %v898 = vxor.u32 %v897, 2147483648
  %v899 = vmul.f32 %v898, 1.442695
  %v900 = vpow.pop %v899
  %v901 = vadd.f32 %v900, 1.0
  %v902 = vrcp.pop %v901
  %v903 = vmul.f32 1.0, %v902
  %v904 = vadd.f32 %v274, %v853
  %v905 = vxor.u32 %v904, 2147483648
  %v906 = vmul.f32 %v905, 1.442695
  %v907 = vpow.pop %v906
  %v908 = vadd.f32 %v907, 1.0
  %v909 = vrcp.pop %v908
  %v910 = vmul.f32 1.0, %v909
  %v911 = vmul.f32 %v903, %v892
  %v912 = vadd.f32 %v322, %v911
  %v913 = vtanh.pop %v912
  %v914 = vsub.f32 1.0, %v910
  %v915 = vmul.f32 %v914, %v913
  %v916 = vmul.f32 %v910, %v813
  %v917 = vadd.f32 %v915, %v916
  %918 = vst [vmem:[#allocation2 + $0x18] sm:$0xff] %v917
  %v919 = vld [vmem:[#allocation2] sm:$0xff]
  %v920 = vld [vmem:[#allocation2 + $0x8] sm:$0xff]
  %v921 = vld [vmem:[#allocation2 + $0x10] sm:$0xff]
  %v922 = vld [vmem:[#allocation2 + $0x18] sm:$0xff]
  %v923 = vpack.c.bf16 %v920, %v919
  %v924 = vpack.c.bf16 %v922, %v921
  %v925 = vld [vmem:[%s6] sm:$0xf]
  %v926 = vld [vmem:[%s6 + $0x4] sm:$0xf]
  %v927 = vld [vmem:[%s6 + $0x8] sm:$0xf]
  %v928 = vld [vmem:[%s6 + $0xc] sm:$0xf]
  %v929 = vld [vmem:[%s6 + $0x10] sm:$0xf]
  %v930 = vld [vmem:[%s6 + $0x14] sm:$0xf]
  %v931 = vld [vmem:[%s6 + $0x18] sm:$0xf]
  %v932 = vld [vmem:[%s6 + $0x1c] sm:$0xf]
  %v933 = vld [vmem:[%s6 + $0x20] sm:$0xf]
  %v934 = vld [vmem:[%s6 + $0x24] sm:$0xf]
  %v935 = vld [vmem:[%s6 + $0x28] sm:$0xf]
  %v936 = vld [vmem:[%s6 + $0x2c] sm:$0xf]
  %v937 = vld [vmem:[%s6 + $0x30] sm:$0xf]
  %v938 = vld [vmem:[%s6 + $0x34] sm:$0xf]
  %v939 = vld [vmem:[%s6 + $0x38] sm:$0xf]
  %v940 = vld [vmem:[%s6 + $0x3c] sm:$0xf]
  %v941 = vld [vmem:[%s7] sm:$0x1]
  %v943 = vlaneseq
  %v944 = vshrl.u32 %v943, 7
  %v945 = vsub.s32 0, %v944
  %v946 = vrot.slane %v941, %v945
  %v964 = vunpack.c.l.b16 %v925
  %v965 = vunpack.c.l.b16 %v926
  %v966 = vunpack.c.l.b16 %v927
  %v967 = vunpack.c.l.b16 %v928
  %v968 = vunpack.c.l.b16 %v929
  %v969 = vunpack.c.l.b16 %v930
  %v970 = vunpack.c.l.b16 %v931
  %v971 = vunpack.c.l.b16 %v932
  %v972 = vunpack.c.l.b16 %v933
  %v973 = vunpack.c.l.b16 %v934
  %v974 = vunpack.c.l.b16 %v935
  %v975 = vunpack.c.l.b16 %v936
  %v976 = vunpack.c.l.b16 %v937
  %v977 = vunpack.c.l.b16 %v938
  %v978 = vunpack.c.l.b16 %v939
  %v979 = vunpack.c.l.b16 %v940
  %v980 = vpack.c.b16 %v965, %v964
  %v981 = vpack.c.b16 %v967, %v966
  %v982 = vpack.c.b16 %v969, %v968
  %v983 = vpack.c.b16 %v971, %v970
  %v984 = vpack.c.b16 %v973, %v972
  %v985 = vpack.c.b16 %v975, %v974
  %v986 = vpack.c.b16 %v977, %v976
  %v987 = vpack.c.b16 %v979, %v978
  %996 = vmatprep.subr.bf16.mxu0 0
  %997 = vmatpush1.bf16.msra.mxu0 %v987
  %998 = vmatprep.subr.bf16.mxu0 0
  %999 = vmatpush1.bf16.msra.mxu0 %v986
  %1000 = vmatprep.subr.bf16.mxu0 0
  %1001 = vmatpush1.bf16.msra.mxu0 %v985
  %1002 = vmatprep.subr.bf16.mxu0 0
  %1003 = vmatpush1.bf16.msra.mxu0 %v984
  %1004 = vmatprep.subr.bf16.mxu0 0
  %1005 = vmatpush1.bf16.msra.mxu0 %v983
  %1006 = vmatprep.subr.bf16.mxu0 0
  %1007 = vmatpush1.bf16.msra.mxu0 %v982
  %1008 = vmatprep.subr.bf16.mxu0 0
  %1009 = vmatpush1.bf16.msra.mxu0 %v981
  %1010 = vmatprep.subr.bf16.mxu0 0
  %1011 = vmatpush1.bf16.msra.mxu0 %v980
  %1012 = vmatprep.subr.bf16.mxu0 0
  %1013 = vmatpush2.bf16.msra.mxu0 0
  %1014 = vmatprep.subr.bf16.mxu0 0
  %1015 = vmatpush2.bf16.msra.mxu0 0
  %1016 = vmatprep.subr.bf16.mxu0 0
  %1017 = vmatpush2.bf16.msra.mxu0 0
  %1018 = vmatprep.subr.bf16.mxu0 0
  %1019 = vmatpush2.bf16.msra.mxu0 0
  %1020 = vmatprep.subr.bf16.mxu0 0
  %1021 = vmatpush2.bf16.msra.mxu0 0
  %1022 = vmatprep.subr.bf16.mxu0 0
  %1023 = vmatpush2.bf16.msra.mxu0 0
  %1024 = vmatprep.subr.bf16.mxu0 0
  %1025 = vmatpush2.bf16.msra.mxu0 0
  %1026 = vmatprep.subr.bf16.mxu0 0
  %1027 = vmatpush2.bf16.msra.mxu0 0
  %1028 = vmatprep.mubr.bf16.mxu0 0
  %1029 = vmatmul.mubr.bf16.gmra.mxu0 %v923
  %v1030 = vpop.f32.mrf.mxu0
  %v1031 = vadd.f32 %v946, %v1030
  %v1032 = vpop.f32.mrf.mxu0
  %v1033 = vpop.f32.mrf.mxu0
  %v1034 = vadd.f32 %v946, %v1033
  %v1035 = vpop.f32.mrf.mxu0
  %1036 = vmatprep.mubr.bf16.mxu0 0
  %1037 = vmatmul.mubr.bf16.gmra.mxu0 %v924
  %v1038 = vpop.f32.mrf.mxu0
  %v1039 = vadd.f32 %v946, %v1038
  %v1040 = vpop.f32.mrf.mxu0
  %v1041 = vpop.f32.mrf.mxu0
  %v1042 = vadd.f32 %v946, %v1041
  %v1043 = vpop.f32.mrf.mxu0
  %1044 = vdwg.mxu0
  %1045 = vst [vmem:[%s8] sm:$0xff] %v1031
  %1046 = vst [vmem:[%s8 + $0x8] sm:$0xff] %v1034
  %1047 = vst [vmem:[%s8 + $0x10] sm:$0xff] %v1039
  %1048 = vst [vmem:[%s8 + $0x18] sm:$0xff] %v1042
  // Predicated region
  $region34: #{graph2seq_forward.3} parent=0 // pred_check
    _
  $region35: #{graph2seq_forward.3} parent=0 // pred_check_branch
    %1050 = sbr.rel (0) target = $region37
  $region36: #{graph2seq_forward.3} parent=0 // pred_region
    _
  $region37: #{graph2seq_forward.3} parent=0 // pred_fallthru
    _
  // Predicated region
  $region38: #{graph2seq_forward.3} parent=0 // pred_check
    _
  $region39: #{graph2seq_forward.3} parent=0 // pred_check_branch
    %1052 = sbr.rel (0) target = $region41
  $region40: #{graph2seq_forward.3} parent=0 // pred_region
    _
  $region41: #{graph2seq_forward.3} parent=0 // pred_fallthru
    _

</llo_original>
